<compile_context>
chip_gen: v5e
topology: v5e:2x2
jax: 0.10.0
libtpu: 0.0.40
codegen_flags: <defaults>
</compile_context>

<pallas_src>
import functools

import jax
import jax.numpy as jnp
import numpy as np
from jax import lax
from jax.experimental import pallas as pl
from jax.experimental.pallas import tpu as pltpu


# ------------------------------------------------------------------
# Row-tiled linear:  x @ w + b
# ------------------------------------------------------------------

def _row_tile(M, target=512):
    if M <= target:
        return M                      # full dim is always a legal block size
    return max(8, (target // 8) * 8)  # multiple of 8 sublanes when tiling


def _linear_kernel(x_ref, w_ref, b_ref, o_ref):
    acc = jnp.dot(x_ref[...], w_ref[...], preferred_element_type=jnp.float32)
    o_ref[...] = (acc + b_ref[...].astype(jnp.float32)).astype(o_ref.dtype)


def linear_pallas(x, w, b, *, tile_m=512):
    M, Din = x.shape
    Dout = w.shape[1]
    tm = _row_tile(M, tile_m)
    return pl.pallas_call(
        _linear_kernel,
        out_shape=jax.ShapeDtypeStruct((M, Dout), x.dtype),
        grid=(pl.cdiv(M, tm),),
        in_specs=[
            pl.BlockSpec((tm, Din), lambda i: (i, 0)),
            pl.BlockSpec((Din, Dout), lambda i: (0, 0)),
            pl.BlockSpec((1, Dout), lambda i: (0, 0)),
        ],
        out_specs=pl.BlockSpec((tm, Dout), lambda i: (i, 0)),
        compiler_params=pltpu.CompilerParams(dimension_semantics=("parallel",)),
    )(x, w, b)


# ------------------------------------------------------------------
# Fused final projection: (a + b + 2*lepe) @ w + 2*bias
#   == wo(a + lepe) + wo(b + lepe)   (one matmul instead of two)
# ------------------------------------------------------------------

def _sum_proj_kernel(a_ref, b_ref, l_ref, w_ref, bias_ref, o_ref):
    s = (a_ref[...].astype(jnp.float32) + b_ref[...].astype(jnp.float32)
         + 2.0 * l_ref[...].astype(jnp.float32))
    acc = jnp.dot(s, w_ref[...].astype(jnp.float32),
                  preferred_element_type=jnp.float32)
    o_ref[...] = (acc + 2.0 * bias_ref[...].astype(jnp.float32)).astype(o_ref.dtype)


def sum_proj_pallas(a, b, lepe, w, bias, *, tile_m=512):
    M, Din = a.shape
    Dout = w.shape[1]
    tm = _row_tile(M, tile_m)
    return pl.pallas_call(
        _sum_proj_kernel,
        out_shape=jax.ShapeDtypeStruct((M, Dout), a.dtype),
        grid=(pl.cdiv(M, tm),),
        in_specs=[
            pl.BlockSpec((tm, Din), lambda i: (i, 0)),
            pl.BlockSpec((tm, Din), lambda i: (i, 0)),
            pl.BlockSpec((tm, Din), lambda i: (i, 0)),
            pl.BlockSpec((Din, Dout), lambda i: (0, 0)),
            pl.BlockSpec((1, Dout), lambda i: (0, 0)),
        ],
        out_specs=pl.BlockSpec((tm, Dout), lambda i: (i, 0)),
        compiler_params=pltpu.CompilerParams(dimension_semantics=("parallel",)),
    )(a, b, lepe, w, bias)


# ------------------------------------------------------------------
# Routed multi-head window attention with fused top-k gather.
#   grid = (N, p2, topk); r_idx is scalar-prefetched into SMEM and selects the
#   kv source-window block; softmax is accumulated online over the topk axis.
#   Both inputs are the same (N, p2, w2, 2*qk_dim+dim) qkv window buffer so no
#   q/kv slices are materialized in HBM — q/k/v are sliced in-register.
# ------------------------------------------------------------------

def _routed_attn_kernel(r_idx_ref, q_ref, kv_ref, o_ref, m_sc, l_sc, acc_sc, *,
                        scale, num_heads, qk_dim, dim):
    del r_idx_ref  # only consumed by the index_maps
    t = pl.program_id(2)
    c_qk = qk_dim // num_heads
    c_v = dim // num_heads

    @pl.when(t == 0)
    def _init():
        m_sc[...] = jnp.full_like(m_sc, -jnp.inf)
        l_sc[...] = jnp.zeros_like(l_sc)
        acc_sc[...] = jnp.zeros_like(acc_sc)

    qwin = q_ref[...].astype(jnp.float32)                 # (w2, 2*qk+dim) own window
    kvwin = kv_ref[...].astype(jnp.float32)               # (w2, 2*qk+dim) routed window

    m_prev = m_sc[...]                                    # (w2, heads)
    l_prev = l_sc[...]                                    # (w2, heads)
    acc_prev = acc_sc[...]                                # (w2, dim)

    m_cols, l_cols, acc_cols = [], [], []
    for h in range(num_heads):
        q_h = qwin[:, h * c_qk:(h + 1) * c_qk] * scale            # (w2, c_qk)
        k_h = kvwin[:, qk_dim + h * c_qk: qk_dim + (h + 1) * c_qk]  # (w2, c_qk)
        v_h = kvwin[:, 2 * qk_dim + h * c_v: 2 * qk_dim + (h + 1) * c_v]  # (w2, c_v)
        # q @ k^T on the MXU, K untransposed (contract feature dims).
        s = lax.dot_general(q_h, k_h, (((1,), (1,)), ((), ())),
                            preferred_element_type=jnp.float32)    # (w2, w2)
        m_p = m_prev[:, h:h + 1]
        m_n = jnp.maximum(m_p, jnp.max(s, axis=-1, keepdims=True))
        alpha = jnp.exp(m_p - m_n)
        p = jnp.exp(s - m_n)
        l_n = alpha * l_prev[:, h:h + 1] + jnp.sum(p, axis=-1, keepdims=True)
        acc_n = alpha * acc_prev[:, h * c_v:(h + 1) * c_v] + jnp.dot(
            p, v_h, preferred_element_type=jnp.float32)
        m_cols.append(m_n)
        l_cols.append(l_n)
        acc_cols.append(acc_n)

    m_sc[...] = jnp.concatenate(m_cols, axis=-1)
    l_sc[...] = jnp.concatenate(l_cols, axis=-1)
    acc_sc[...] = jnp.concatenate(acc_cols, axis=-1)

    @pl.when(t == pl.num_programs(2) - 1)
    def _finalize():
        inv = pl.reciprocal(l_sc[...], approx=True)       # EUP, frees VALU slots
        acc = acc_sc[...]
        cols = [acc[:, h * c_v:(h + 1) * c_v] * inv[:, h:h + 1]
                for h in range(num_heads)]
        # single lane-dense (w2, num_heads*c_v) store
        o_ref[...] = jnp.concatenate(cols, axis=-1).astype(o_ref.dtype)


def routed_window_attention_pallas(win, r_idx, scale, num_heads, qk_dim, dim):
    # win: (N, p2, w2, 2*qk_dim+dim)   (full qkv per window pixel)
    # r_idx: (N, p2, topk) int         -> out: (N, p2, w2, dim)
    N, p2, w2, c_qkv = win.shape
    topk = r_idx.shape[-1]
    r_flat = r_idx.reshape(-1).astype(jnp.int32)

    kern = functools.partial(_routed_attn_kernel, scale=scale,
                             num_heads=num_heads, qk_dim=qk_dim, dim=dim)
    grid_spec = pltpu.PrefetchScalarGridSpec(
        num_scalar_prefetch=1,
        grid=(N, p2, topk),
        in_specs=[
            # own window (block index constant along topk -> fetched once)
            pl.BlockSpec((None, None, w2, c_qkv),
                         lambda n, p, t, r: (n, p, 0, 0)),
            # data-dependent source-window gather via scalar prefetch
            pl.BlockSpec((None, None, w2, c_qkv),
                         lambda n, p, t, r: (n, r[(n * p2 + p) * topk + t], 0, 0)),
        ],
        out_specs=pl.BlockSpec((None, None, w2, dim),
                               lambda n, p, t, r: (n, p, 0, 0)),
        scratch_shapes=[
            pltpu.VMEM((w2, num_heads), jnp.float32),     # running max
            pltpu.VMEM((w2, num_heads), jnp.float32),     # running denom
            pltpu.VMEM((w2, dim), jnp.float32),           # running numerator
        ],
    )
    return pl.pallas_call(
        kern,
        out_shape=jax.ShapeDtypeStruct((N, p2, w2, dim), win.dtype),
        grid_spec=grid_spec,
        compiler_params=pltpu.CompilerParams(
            dimension_semantics=("parallel", "parallel", "arbitrary")),
    )(r_flat, win, win)


# ------------------------------------------------------------------
# Depthwise 3x3 LePE conv (padding=1, groups=C)
# ------------------------------------------------------------------

def _dwconv3x3_kernel(x_ref, w_ref, b_ref, o_ref):
    H, W, C = o_ref.shape
    wt = w_ref[...].astype(jnp.float32)                   # (3, 3, C)
    acc = jnp.zeros((H, W, C), jnp.float32)
    for dh in range(3):
        for dw in range(3):
            acc = acc + x_ref[dh:dh + H, dw:dw + W, :].astype(jnp.float32) * wt[dh, dw]
    o_ref[...] = (acc + b_ref[...].astype(jnp.float32)).astype(o_ref.dtype)


def dwconv3x3_pallas(img, w, b):
    # img: (N, H, W, C), w: (3, 3, C), b: (1, C)
    # TODO(synk): for large H/W (v7x 64 MiB VMEM) tile over row bands with an
    # in-kernel 2-row halo instead of jnp.pad-ing the full image through HBM.
    N, H, W, C = img.shape
    xpad = jnp.pad(img, ((0, 0), (1, 1), (1, 1), (0, 0)))
    return pl.pallas_call(
        _dwconv3x3_kernel,
        out_shape=jax.ShapeDtypeStruct((N, H, W, C), img.dtype),
        grid=(N,),
        in_specs=[
            pl.BlockSpec((None, H + 2, W + 2, C), lambda n: (n, 0, 0, 0)),
            pl.BlockSpec((3, 3, C), lambda n: (0, 0, 0)),
            pl.BlockSpec((1, C), lambda n: (0, 0)),
        ],
        out_specs=pl.BlockSpec((None, H, W, C), lambda n: (n, 0, 0, 0)),
        compiler_params=pltpu.CompilerParams(dimension_semantics=("parallel",)),
    )(xpad, w, b)


# ------------------------------------------------------------------
# Router logits: (q_win * scale) @ k_win^T per image
# ------------------------------------------------------------------

def _router_kernel(q_ref, k_ref, o_ref, *, scale):
    q = q_ref[...].astype(jnp.float32) * scale            # (p2, qk)
    k = k_ref[...].astype(jnp.float32)                    # (p2, qk)
    o_ref[...] = lax.dot_general(q, k, (((1,), (1,)), ((), ())),
                                 preferred_element_type=jnp.float32
                                 ).astype(o_ref.dtype)


def router_logits_pallas(q_win, k_win, scale):
    N, p2, qk = q_win.shape
    kern = functools.partial(_router_kernel, scale=scale)
    return pl.pallas_call(
        kern,
        out_shape=jax.ShapeDtypeStruct((N, p2, p2), q_win.dtype),
        grid=(N,),
        in_specs=[
            pl.BlockSpec((None, p2, qk), lambda n: (n, 0, 0)),
            pl.BlockSpec((None, p2, qk), lambda n: (n, 0, 0)),
        ],
        out_specs=pl.BlockSpec((None, p2, p2), lambda n: (n, 0, 0)),
        compiler_params=pltpu.CompilerParams(dimension_semantics=("parallel",)),
    )(q_win, k_win)


# ------------------------------------------------------------------
# Full ARAttention forward, Pallas path
# (param_routing=False, diff_routing=False, soft_routing=False -> mul_weight
#  'none'; kv_downsample='identity'; param_attention='qkvo'; side_dwconv=3; s=1)
# ------------------------------------------------------------------

def ar_attention_pallas(x_nchw, params, *, num_heads, qk_dim, topk, w_v, w_h):
    N, C, H, W = x_nchw.shape
    dim = C
    scale = qk_dim ** (-0.5)
    c_qkv = 2 * qk_dim + dim
    v_win = H // w_v
    h_win = W // w_h

    x = jnp.transpose(x_nchw, (0, 2, 3, 1))               # (N, H, W, C)

    # Shared QKV projection (one row-tiled Pallas matmul for BOTH branches).
    qkv = linear_pallas(x.reshape(-1, C), params['w_qkv'], params['b_qkv'])
    qkv = qkv.reshape(N, H, W, c_qkv)

    # Shared LePE depthwise conv on the V image (identical for both branches).
    lepe = dwconv3x3_pallas(qkv[..., 2 * qk_dim:], params['w_lepe'],
                            params['b_lepe'])             # (N, H, W, dim)

    def branch_windows(branch):
        if branch == 0:
            # 'n (j h) (i w) c -> n (j i) (h w) c', j=v_win, i=1: pure reshape.
            return qkv.reshape(N, v_win, w_v * W, c_qkv)
        # j=1, i=h_win: needs one transpose.
        t = qkv.reshape(N, H, h_win, w_h, c_qkv)
        return jnp.transpose(t, (0, 2, 1, 3, 4)).reshape(N, h_win, H * w_h, c_qkv)

    def windows_to_image(out, branch):
        if branch == 0:
            return out.reshape(N, H, W, dim)
        t = out.reshape(N, h_win, H, w_h, dim)
        return jnp.transpose(t, (0, 2, 1, 3, 4)).reshape(N, H, W, dim)

    def branch_attn(branch):
        win = branch_windows(branch)                      # (N, p2, w2, c_qkv)
        # Router inputs: per-window means (tiny, stays fused in XLA).
        q_win = win[..., :qk_dim].mean(axis=2)            # (N, p2, qk)
        k_win = win[..., qk_dim:2 * qk_dim].mean(axis=2)  # (N, p2, qk)

        # Router (DF): logits via Pallas MXU, top-k in glue.
        # r_weight = softmax(topk logits) is unused for mul_weight='none'.
        logits = router_logits_pallas(q_win, k_win, scale)
        _, r_idx = lax.top_k(logits, topk)                # (N, p2, topk)

        # Routed multi-head window attention: top-k gather fused into the
        # attention kernel via scalar prefetch (no XLA gather / q-kv slices).
        out = routed_window_attention_pallas(win, r_idx, scale, num_heads,
                                             qk_dim, dim)
        return windows_to_image(out, branch)

    o1 = branch_attn(0)     # vertical-strip windows
    o2 = branch_attn(1)     # horizontal-strip windows

    # wo(o1 + lepe) + wo(o2 + lepe) == (o1 + o2 + 2*lepe) @ Wo + 2*bo.
    out = sum_proj_pallas(o1.reshape(-1, dim), o2.reshape(-1, dim),
                          lepe.reshape(-1, dim), params['w_o'], params['b_o'])
    out = out.reshape(N, H, W, dim)
    return jnp.transpose(out, (0, 3, 1, 2))               # back to NCHW


# ------------------------------------------------------------------
# Pure-JAX reference (mirrors the PyTorch module, for correctness check)
# ------------------------------------------------------------------

def ar_attention_ref(x_nchw, params, *, num_heads, qk_dim, topk, w_v, w_h):
    N, C, H, W = x_nchw.shape
    dim = C
    scale = qk_dim ** (-0.5)
    x = jnp.transpose(x_nchw, (0, 2, 3, 1))
    v_win, h_win, s = H // w_v, W // w_h, 1
    c_qk = qk_dim // num_heads
    c_v = dim // num_heads

    def to_windows(img, j, i):
        Nn, Hh, Ww, Cc = img.shape
        h, w = Hh // j, Ww // i
        t = img.reshape(Nn, j, h, i, w, Cc)
        return jnp.transpose(t, (0, 1, 3, 2, 4, 5)).reshape(Nn, j * i, h, w, Cc)

    def to_image(win, j, i):
        Nn, p2, h, w, Cc = win.shape
        t = win.reshape(Nn, j, i, h, w, Cc)
        return jnp.transpose(t, (0, 1, 3, 2, 4, 5)).reshape(Nn, j * h, i * w, Cc)

    def branch(j, i):
        win = to_windows(x, j, i)
        Nn, p2, h, w, Cc = win.shape
        w2 = h * w
        qkv = win.reshape(-1, Cc) @ params['w_qkv'] + params['b_qkv']
        qkv = qkv.reshape(Nn, p2, h, w, -1)
        q = qkv[..., :qk_dim]
        kv = qkv[..., qk_dim:]
        q_pix = q.reshape(Nn, p2, w2, qk_dim)
        kv_pix = kv.reshape(Nn, p2, w2, qk_dim + dim)
        q_win = q.mean(axis=(2, 3))
        k_win = kv[..., :qk_dim].mean(axis=(2, 3))

        v_img = to_image(kv[..., qk_dim:], j, i)
        lepe = lax.conv_general_dilated(
            v_img, params['w_lepe'][:, :, None, :], (1, 1), 'SAME',
            dimension_numbers=('NHWC', 'HWIO', 'NHWC'),
            feature_group_count=dim) + params['b_lepe']

        logits = jnp.einsum('npc,nqc->npq', q_win * scale, k_win)
        _, r_idx = lax.top_k(logits, topk)
        gathered = jax.vmap(lambda kvp, idx: kvp[idx])(kv_pix, r_idx)  # (N,p2,k,w2,ckv)
        k_sel = gathered[..., :qk_dim].reshape(Nn, p2, topk * w2, num_heads, c_qk)
        v_sel = gathered[..., qk_dim:].reshape(Nn, p2, topk * w2, num_heads, c_v)
        q_mh = q_pix.reshape(Nn, p2, w2, num_heads, c_qk)
        att = jnp.einsum('npqhc,npkhc->nphqk', q_mh * scale, k_sel)
        p = jax.nn.softmax(att, axis=-1)
        o = jnp.einsum('nphqk,npkhc->npqhc', p, v_sel).reshape(Nn, p2, h, w, dim)
        o_img = to_image(o, j, i) + lepe
        o_img = o_img.reshape(-1, dim) @ params['w_o'] + params['b_o']
        return o_img.reshape(Nn, H, W, dim)

    out = branch(v_win, s) + branch(s, h_win)
    return jnp.transpose(out, (0, 3, 1, 2))


# ------------------------------------------------------------------
# Demo / self-test
# ------------------------------------------------------------------

if __name__ == "__main__":
    key = jax.random.PRNGKey(0)
    N, dim, H, W = 2, 32, 8, 8
    num_heads, qk_dim, topk, w_v, w_h = 4, 32, 2, 2, 2

    ks = jax.random.split(key, 8)
    params = {
        'w_qkv': 0.1 * jax.random.normal(ks[0], (dim, 2 * qk_dim + dim), jnp.float32),
        'b_qkv': 0.1 * jax.random.normal(ks[1], (1, 2 * qk_dim + dim), jnp.float32),
        'w_o':   0.1 * jax.random.normal(ks[2], (dim, dim), jnp.float32),
        'b_o':   0.1 * jax.random.normal(ks[3], (1, dim), jnp.float32),
        'w_lepe': 0.1 * jax.random.normal(ks[4], (3, 3, dim), jnp.float32),
        'b_lepe': 0.1 * jax.random.normal(ks[5], (1, dim), jnp.float32),
    }
    x = jax.random.normal(ks[6], (N, dim, H, W), jnp.float32)

    fwd_pallas = jax.jit(functools.partial(
        ar_attention_pallas, num_heads=num_heads, qk_dim=qk_dim, topk=topk,
        w_v=w_v, w_h=w_h))
    fwd_ref = jax.jit(functools.partial(
        ar_attention_ref, num_heads=num_heads, qk_dim=qk_dim, topk=topk,
        w_v=w_v, w_h=w_h))

    out = jax.block_until_ready(fwd_pallas(x, params))
    ref = jax.block_until_ready(fwd_ref(x, params))

    assert out.shape == (N, dim, H, W), out.shape
    # tolerance covers the EUP approx-reciprocal softmax normalization and the
    # algebraic fusion of the two output projections
    np.testing.assert_allclose(np.asarray(out), np.asarray(ref),
                               rtol=5e-3, atol=5e-3)
    print("KERNEL_OK")
</pallas_src>

<mosaic_0001>
module attributes {stable_mosaic.version = 11 : i64} {
  func.func @_linear_kernel(%arg0: i32, %arg1: memref<128x32xf32, #tpu.memory_space<vmem>>, %arg2: memref<32x96xf32, #tpu.memory_space<vmem>>, %arg3: memref<1x96xf32, #tpu.memory_space<vmem>>, %arg4: memref<128x96xf32, #tpu.memory_space<vmem>>) attributes {dimension_semantics = [#tpu.dimension_semantics<parallel>], iteration_bounds = array<i64: 1>, scalar_prefetch = 0 : i64, scratch_operands = 0 : i64, tpu.core_type = #tpu.core_type<tc>, window_params = [{transform_indices = @transform_0, window_bounds = array<i64: 128, 32>}, {pipeline_mode = #tpu.pipeline_mode<synchronous>, transform_indices = @transform_1, window_bounds = array<i64: 32, 96>}, {pipeline_mode = #tpu.pipeline_mode<synchronous>, transform_indices = @transform_2, window_bounds = array<i64: 1, 96>}, {transform_indices = @transform_3, window_bounds = array<i64: 128, 96>}]} {
    %c0 = arith.constant 0 : index
    %c0_0 = arith.constant 0 : index
    %0 = vector.load %arg1[%c0, %c0_0] : memref<128x32xf32, #tpu.memory_space<vmem>>, vector<128x32xf32>
    %c0_1 = arith.constant 0 : index
    %c0_2 = arith.constant 0 : index
    %1 = vector.load %arg2[%c0_1, %c0_2] : memref<32x96xf32, #tpu.memory_space<vmem>>, vector<32x96xf32>
    %cst = arith.constant dense<0.000000e+00> : vector<128x96xf32>
    %2 = tpu.matmul %0, %1, %cst {dimension_numbers = #tpu.dot_dimension_numbers<[1], [0], [0], [1], [0, 0, 1, 1], [], []>} : vector<128x32xf32>, vector<32x96xf32>, vector<128x96xf32> -> vector<128x96xf32>
    %c0_3 = arith.constant 0 : index
    %c0_4 = arith.constant 0 : index
    %3 = vector.load %arg3[%c0_3, %c0_4] : memref<1x96xf32, #tpu.memory_space<vmem>>, vector<1x96xf32>
    %4 = vector.broadcast %3 : vector<1x96xf32> to vector<128x96xf32>
    %5 = arith.addf %2, %4 : vector<128x96xf32>
    %c0_5 = arith.constant 0 : index
    %c0_6 = arith.constant 0 : index
    %6 = vector.load %arg4[%c0_5, %c0_6] : memref<128x96xf32, #tpu.memory_space<vmem>>, vector<128x96xf32>
    tpu.vector_store %arg4[%c0_5, %c0_6], %5 {strides = array<i32>} : memref<128x96xf32, #tpu.memory_space<vmem>>, vector<128x96xf32>,
    return
  }
  func.func @transform_0(%arg0: i32) -> (i32, i32) {
    %c0_i32 = arith.constant 0 : i32
    %c0_i32_0 = arith.constant 0 : i32
    return %arg0, %c0_i32 : i32, i32
  }
  func.func @transform_1(%arg0: i32) -> (i32, i32) {
    %c0_i32 = arith.constant 0 : i32
    %c0_i32_0 = arith.constant 0 : i32
    %c0_i32_1 = arith.constant 0 : i32
    return %c0_i32, %c0_i32_0 : i32, i32
  }
  func.func @transform_2(%arg0: i32) -> (i32, i32) {
    %c0_i32 = arith.constant 0 : i32
    %c0_i32_0 = arith.constant 0 : i32
    %c0_i32_1 = arith.constant 0 : i32
    return %c0_i32, %c0_i32_0 : i32, i32
  }
  func.func @transform_3(%arg0: i32) -> (i32, i32) {
    %c0_i32 = arith.constant 0 : i32
    %c0_i32_0 = arith.constant 0 : i32
    return %arg0, %c0_i32 : i32, i32
  }
}

module attributes {stable_mosaic.version = 11 : i64} {
  func.func @_router_kernel(%arg0: i32, %arg1: memref<1x4x32xf32, #tpu.memory_space<vmem>>, %arg2: memref<1x4x32xf32, #tpu.memory_space<vmem>>, %arg3: memref<1x4x4xf32, #tpu.memory_space<vmem>>) attributes {dimension_semantics = [#tpu.dimension_semantics<parallel>], iteration_bounds = array<i64: 2>, scalar_prefetch = 0 : i64, scratch_operands = 0 : i64, tpu.core_type = #tpu.core_type<tc>, window_params = [{transform_indices = @transform_0, window_bounds = array<i64: 1, 4, 32>}, {transform_indices = @transform_1, window_bounds = array<i64: 1, 4, 32>}, {transform_indices = @transform_2, window_bounds = array<i64: 1, 4, 4>}]} {
    %c0 = arith.constant 0 : index
    %c0_0 = arith.constant 0 : index
    %c0_1 = arith.constant 0 : index
    %0 = vector.load %arg1[%c0, %c0_0, %c0_1] : memref<1x4x32xf32, #tpu.memory_space<vmem>>, vector<1x4x32xf32>
    %1 = vector.shape_cast %0 : vector<1x4x32xf32> to vector<4x32xf32>
    %cst = arith.constant 0.176776692 : f32
    %2 = vector.broadcast %cst : f32 to vector<4x32xf32>
    %3 = arith.mulf %1, %2 : vector<4x32xf32>
    %c0_2 = arith.constant 0 : index
    %c0_3 = arith.constant 0 : index
    %c0_4 = arith.constant 0 : index
    %4 = vector.load %arg2[%c0_2, %c0_3, %c0_4] : memref<1x4x32xf32, #tpu.memory_space<vmem>>, vector<1x4x32xf32>
    %5 = vector.shape_cast %4 : vector<1x4x32xf32> to vector<4x32xf32>
    %cst_5 = arith.constant dense<0.000000e+00> : vector<4x4xf32>
    %6 = tpu.matmul %3, %5, %cst_5 {dimension_numbers = #tpu.dot_dimension_numbers<[1], [1], [0], [0], [0, 0, 1, 0], [], []>} : vector<4x32xf32>, vector<4x32xf32>, vector<4x4xf32> -> vector<4x4xf32>
    %c0_6 = arith.constant 0 : index
    %c0_7 = arith.constant 0 : index
    %c0_8 = arith.constant 0 : index
    %7 = vector.load %arg3[%c0_6, %c0_7, %c0_8] : memref<1x4x4xf32, #tpu.memory_space<vmem>>, vector<1x4x4xf32>
    %8 = vector.shape_cast %7 : vector<1x4x4xf32> to vector<4x4xf32>
    %9 = vector.shape_cast %6 : vector<4x4xf32> to vector<1x4x4xf32>
    tpu.vector_store %arg3[%c0_6, %c0_7, %c0_8], %9 {strides = array<i32>} : memref<1x4x4xf32, #tpu.memory_space<vmem>>, vector<1x4x4xf32>,
    return
  }
  func.func @transform_0(%arg0: i32) -> (i32, i32, i32) {
    %c0_i32 = arith.constant 0 : i32
    %c0_i32_0 = arith.constant 0 : i32
    %c0_i32_1 = arith.constant 0 : i32
    return %arg0, %c0_i32, %c0_i32_0 : i32, i32, i32
  }
  func.func @transform_1(%arg0: i32) -> (i32, i32, i32) {
    %c0_i32 = arith.constant 0 : i32
    %c0_i32_0 = arith.constant 0 : i32
    %c0_i32_1 = arith.constant 0 : i32
    return %arg0, %c0_i32, %c0_i32_0 : i32, i32, i32
  }
  func.func @transform_2(%arg0: i32) -> (i32, i32, i32) {
    %c0_i32 = arith.constant 0 : i32
    %c0_i32_0 = arith.constant 0 : i32
    %c0_i32_1 = arith.constant 0 : i32
    return %arg0, %c0_i32, %c0_i32_0 : i32, i32, i32
  }
}

module attributes {stable_mosaic.version = 11 : i64} {
  func.func @_routed_attn_kernel(%arg0: i32, %arg1: i32, %arg2: i32, %arg3: memref<16xi32, #tpu.memory_space<smem>>, %arg4: memref<1x1x16x96xf32, #tpu.memory_space<vmem>>, %arg5: memref<1x1x16x96xf32, #tpu.memory_space<vmem>>, %arg6: memref<1x1x16x32xf32, #tpu.memory_space<vmem>>, %arg7: memref<16x4xf32, #tpu.memory_space<vmem>>, %arg8: memref<16x4xf32, #tpu.memory_space<vmem>>, %arg9: memref<16x32xf32, #tpu.memory_space<vmem>>) attributes {dimension_semantics = [#tpu.dimension_semantics<parallel>, #tpu.dimension_semantics<parallel>, #tpu.dimension_semantics<arbitrary>], iteration_bounds = array<i64: 2, 4, 2>, scalar_prefetch = 1 : i64, scratch_operands = 3 : i64, tpu.core_type = #tpu.core_type<tc>, window_params = [{transform_indices = @transform_0, window_bounds = array<i64: 1, 1, 16, 96>}, {transform_indices = @transform_1, window_bounds = array<i64: 1, 1, 16, 96>}, {transform_indices = @transform_2, window_bounds = array<i64: 1, 1, 16, 32>}]} {
    %c0_i32 = arith.constant 0 : i32
    %0 = arith.cmpi eq, %arg2, %c0_i32 : i32
    %1 = arith.extui %0 : i1 to i32
    %c0_i32_0 = arith.constant 0 : i32
    %2 = arith.cmpi ne, %1, %c0_i32_0 : i32
    scf.if %2 {
      %cst_40 = arith.constant 0xFF800000 : f32
      %119 = vector.broadcast %cst_40 : f32 to vector<16x4xf32>
      %c0_41 = arith.constant 0 : index
      %c0_42 = arith.constant 0 : index
      %120 = vector.load %arg7[%c0_41, %c0_42] : memref<16x4xf32, #tpu.memory_space<vmem>>, vector<16x4xf32>
      tpu.vector_store %arg7[%c0_41, %c0_42], %119 {strides = array<i32>} : memref<16x4xf32, #tpu.memory_space<vmem>>, vector<16x4xf32>,
      %cst_43 = arith.constant 0.000000e+00 : f32
      %121 = vector.broadcast %cst_43 : f32 to vector<16x4xf32>
      %c0_44 = arith.constant 0 : index
      %c0_45 = arith.constant 0 : index
      %122 = vector.load %arg8[%c0_44, %c0_45] : memref<16x4xf32, #tpu.memory_space<vmem>>, vector<16x4xf32>
      tpu.vector_store %arg8[%c0_44, %c0_45], %121 {strides = array<i32>} : memref<16x4xf32, #tpu.memory_space<vmem>>, vector<16x4xf32>,
      %cst_46 = arith.constant 0.000000e+00 : f32
      %123 = vector.broadcast %cst_46 : f32 to vector<16x32xf32>
      %c0_47 = arith.constant 0 : index
      %c0_48 = arith.constant 0 : index
      %124 = vector.load %arg9[%c0_47, %c0_48] : memref<16x32xf32, #tpu.memory_space<vmem>>, vector<16x32xf32>
      tpu.vector_store %arg9[%c0_47, %c0_48], %123 {strides = array<i32>} : memref<16x32xf32, #tpu.memory_space<vmem>>, vector<16x32xf32>,
    } else {
    }
    %c0 = arith.constant 0 : index
    %c0_1 = arith.constant 0 : index
    %c0_2 = arith.constant 0 : index
    %c0_3 = arith.constant 0 : index
    %3 = vector.load %arg4[%c0, %c0_1, %c0_2, %c0_3] : memref<1x1x16x96xf32, #tpu.memory_space<vmem>>, vector<1x1x16x96xf32>
    %4 = vector.shape_cast %3 : vector<1x1x16x96xf32> to vector<16x96xf32>
    %c0_4 = arith.constant 0 : index
    %c0_5 = arith.constant 0 : index
    %c0_6 = arith.constant 0 : index
    %c0_7 = arith.constant 0 : index
    %5 = vector.load %arg5[%c0_4, %c0_5, %c0_6, %c0_7] : memref<1x1x16x96xf32, #tpu.memory_space<vmem>>, vector<1x1x16x96xf32>
    %6 = vector.shape_cast %5 : vector<1x1x16x96xf32> to vector<16x96xf32>
    %c0_8 = arith.constant 0 : index
    %c0_9 = arith.constant 0 : index
    %7 = vector.load %arg7[%c0_8, %c0_9] : memref<16x4xf32, #tpu.memory_space<vmem>>, vector<16x4xf32>
    %c0_10 = arith.constant 0 : index
    %c0_11 = arith.constant 0 : index
    %8 = vector.load %arg8[%c0_10, %c0_11] : memref<16x4xf32, #tpu.memory_space<vmem>>, vector<16x4xf32>
    %c0_12 = arith.constant 0 : index
    %c0_13 = arith.constant 0 : index
    %9 = vector.load %arg9[%c0_12, %c0_13] : memref<16x32xf32, #tpu.memory_space<vmem>>, vector<16x32xf32>
    %10 = vector.extract_strided_slice %4 {offsets = [0, 0], sizes = [16, 8], strides = [1, 1]} : vector<16x96xf32> to vector<16x8xf32>
    %cst = arith.constant 0.176776692 : f32
    %11 = vector.broadcast %cst : f32 to vector<16x8xf32>
    %12 = arith.mulf %10, %11 : vector<16x8xf32>
    %13 = vector.extract_strided_slice %6 {offsets = [0, 32], sizes = [16, 8], strides = [1, 1]} : vector<16x96xf32> to vector<16x8xf32>
    %14 = vector.extract_strided_slice %6 {offsets = [0, 64], sizes = [16, 8], strides = [1, 1]} : vector<16x96xf32> to vector<16x8xf32>
    %cst_14 = arith.constant dense<0.000000e+00> : vector<16x16xf32>
    %15 = tpu.matmul %12, %13, %cst_14 {dimension_numbers = #tpu.dot_dimension_numbers<[1], [1], [0], [0], [0, 0, 1, 0], [], []>} : vector<16x8xf32>, vector<16x8xf32>, vector<16x16xf32> -> vector<16x16xf32>
    %16 = vector.extract_strided_slice %7 {offsets = [0, 0], sizes = [16, 1], strides = [1, 1]} : vector<16x4xf32> to vector<16x1xf32>
    %cst_15 = arith.constant dense<0xFF800000> : vector<16xf32>
    %17 = vector.multi_reduction <maximumf>, %15, %cst_15 [1] : vector<16x16xf32> to vector<16xf32>
    %18 = vector.shape_cast %17 : vector<16xf32> to vector<16x1xf32>
    %19 = arith.maximumf %16, %18 : vector<16x1xf32>
    %20 = arith.subf %16, %19 : vector<16x1xf32>
    %21 = math.exp %20 : vector<16x1xf32>
    %22 = vector.broadcast %19 : vector<16x1xf32> to vector<16x16xf32>
    %23 = arith.subf %15, %22 : vector<16x16xf32>
    %24 = math.exp %23 : vector<16x16xf32>
    %25 = vector.extract_strided_slice %8 {offsets = [0, 0], sizes = [16, 1], strides = [1, 1]} : vector<16x4xf32> to vector<16x1xf32>
    %26 = arith.mulf %21, %25 : vector<16x1xf32>
    %cst_16 = arith.constant dense<0.000000e+00> : vector<16xf32>
    %27 = vector.multi_reduction <add>, %24, %cst_16 [1] : vector<16x16xf32> to vector<16xf32>
    %28 = vector.shape_cast %27 : vector<16xf32> to vector<16x1xf32>
    %29 = arith.addf %26, %28 : vector<16x1xf32>
    %30 = vector.extract_strided_slice %9 {offsets = [0, 0], sizes = [16, 8], strides = [1, 1]} : vector<16x32xf32> to vector<16x8xf32>
    %31 = vector.broadcast %21 : vector<16x1xf32> to vector<16x8xf32>
    %32 = arith.mulf %31, %30 : vector<16x8xf32>
    %cst_17 = arith.constant dense<0.000000e+00> : vector<16x8xf32>
    %33 = tpu.matmul %24, %14, %cst_17 {dimension_numbers = #tpu.dot_dimension_numbers<[1], [0], [0], [1], [0, 0, 1, 1], [], []>} : vector<16x16xf32>, vector<16x8xf32>, vector<16x8xf32> -> vector<16x8xf32>
    %34 = arith.addf %32, %33 : vector<16x8xf32>
    %35 = vector.extract_strided_slice %4 {offsets = [0, 8], sizes = [16, 8], strides = [1, 1]} : vector<16x96xf32> to vector<16x8xf32>
    %cst_18 = arith.constant 0.176776692 : f32
    %36 = vector.broadcast %cst_18 : f32 to vector<16x8xf32>
    %37 = arith.mulf %35, %36 : vector<16x8xf32>
    %38 = vector.extract_strided_slice %6 {offsets = [0, 40], sizes = [16, 8], strides = [1, 1]} : vector<16x96xf32> to vector<16x8xf32>
    %39 = vector.extract_strided_slice %6 {offsets = [0, 72], sizes = [16, 8], strides = [1, 1]} : vector<16x96xf32> to vector<16x8xf32>
    %cst_19 = arith.constant dense<0.000000e+00> : vector<16x16xf32>
    %40 = tpu.matmul %37, %38, %cst_19 {dimension_numbers = #tpu.dot_dimension_numbers<[1], [1], [0], [0], [0, 0, 1, 0], [], []>} : vector<16x8xf32>, vector<16x8xf32>, vector<16x16xf32> -> vector<16x16xf32>
    %41 = vector.extract_strided_slice %7 {offsets = [0, 1], sizes = [16, 1], strides = [1, 1]} : vector<16x4xf32> to vector<16x1xf32>
    %cst_20 = arith.constant dense<0xFF800000> : vector<16xf32>
    %42 = vector.multi_reduction <maximumf>, %40, %cst_20 [1] : vector<16x16xf32> to vector<16xf32>
    %43 = vector.shape_cast %42 : vector<16xf32> to vector<16x1xf32>
    %44 = arith.maximumf %41, %43 : vector<16x1xf32>
    %45 = arith.subf %41, %44 : vector<16x1xf32>
    %46 = math.exp %45 : vector<16x1xf32>
    %47 = vector.broadcast %44 : vector<16x1xf32> to vector<16x16xf32>
    %48 = arith.subf %40, %47 : vector<16x16xf32>
    %49 = math.exp %48 : vector<16x16xf32>
    %50 = vector.extract_strided_slice %8 {offsets = [0, 1], sizes = [16, 1], strides = [1, 1]} : vector<16x4xf32> to vector<16x1xf32>
    %51 = arith.mulf %46, %50 : vector<16x1xf32>
    %cst_21 = arith.constant dense<0.000000e+00> : vector<16xf32>
    %52 = vector.multi_reduction <add>, %49, %cst_21 [1] : vector<16x16xf32> to vector<16xf32>
    %53 = vector.shape_cast %52 : vector<16xf32> to vector<16x1xf32>
    %54 = arith.addf %51, %53 : vector<16x1xf32>
    %55 = vector.extract_strided_slice %9 {offsets = [0, 8], sizes = [16, 8], strides = [1, 1]} : vector<16x32xf32> to vector<16x8xf32>
    %56 = vector.broadcast %46 : vector<16x1xf32> to vector<16x8xf32>
    %57 = arith.mulf %56, %55 : vector<16x8xf32>
    %cst_22 = arith.constant dense<0.000000e+00> : vector<16x8xf32>
    %58 = tpu.matmul %49, %39, %cst_22 {dimension_numbers = #tpu.dot_dimension_numbers<[1], [0], [0], [1], [0, 0, 1, 1], [], []>} : vector<16x16xf32>, vector<16x8xf32>, vector<16x8xf32> -> vector<16x8xf32>
    %59 = arith.addf %57, %58 : vector<16x8xf32>
    %60 = vector.extract_strided_slice %4 {offsets = [0, 16], sizes = [16, 8], strides = [1, 1]} : vector<16x96xf32> to vector<16x8xf32>
    %cst_23 = arith.constant 0.176776692 : f32
    %61 = vector.broadcast %cst_23 : f32 to vector<16x8xf32>
    %62 = arith.mulf %60, %61 : vector<16x8xf32>
    %63 = vector.extract_strided_slice %6 {offsets = [0, 48], sizes = [16, 8], strides = [1, 1]} : vector<16x96xf32> to vector<16x8xf32>
    %64 = vector.extract_strided_slice %6 {offsets = [0, 80], sizes = [16, 8], strides = [1, 1]} : vector<16x96xf32> to vector<16x8xf32>
    %cst_24 = arith.constant dense<0.000000e+00> : vector<16x16xf32>
    %65 = tpu.matmul %62, %63, %cst_24 {dimension_numbers = #tpu.dot_dimension_numbers<[1], [1], [0], [0], [0, 0, 1, 0], [], []>} : vector<16x8xf32>, vector<16x8xf32>, vector<16x16xf32> -> vector<16x16xf32>
    %66 = vector.extract_strided_slice %7 {offsets = [0, 2], sizes = [16, 1], strides = [1, 1]} : vector<16x4xf32> to vector<16x1xf32>
    %cst_25 = arith.constant dense<0xFF800000> : vector<16xf32>
    %67 = vector.multi_reduction <maximumf>, %65, %cst_25 [1] : vector<16x16xf32> to vector<16xf32>
    %68 = vector.shape_cast %67 : vector<16xf32> to vector<16x1xf32>
    %69 = arith.maximumf %66, %68 : vector<16x1xf32>
    %70 = arith.subf %66, %69 : vector<16x1xf32>
    %71 = math.exp %70 : vector<16x1xf32>
    %72 = vector.broadcast %69 : vector<16x1xf32> to vector<16x16xf32>
    %73 = arith.subf %65, %72 : vector<16x16xf32>
    %74 = math.exp %73 : vector<16x16xf32>
    %75 = vector.extract_strided_slice %8 {offsets = [0, 2], sizes = [16, 1], strides = [1, 1]} : vector<16x4xf32> to vector<16x1xf32>
    %76 = arith.mulf %71, %75 : vector<16x1xf32>
    %cst_26 = arith.constant dense<0.000000e+00> : vector<16xf32>
    %77 = vector.multi_reduction <add>, %74, %cst_26 [1] : vector<16x16xf32> to vector<16xf32>
    %78 = vector.shape_cast %77 : vector<16xf32> to vector<16x1xf32>
    %79 = arith.addf %76, %78 : vector<16x1xf32>
    %80 = vector.extract_strided_slice %9 {offsets = [0, 16], sizes = [16, 8], strides = [1, 1]} : vector<16x32xf32> to vector<16x8xf32>
    %81 = vector.broadcast %71 : vector<16x1xf32> to vector<16x8xf32>
    %82 = arith.mulf %81, %80 : vector<16x8xf32>
    %cst_27 = arith.constant dense<0.000000e+00> : vector<16x8xf32>
    %83 = tpu.matmul %74, %64, %cst_27 {dimension_numbers = #tpu.dot_dimension_numbers<[1], [0], [0], [1], [0, 0, 1, 1], [], []>} : vector<16x16xf32>, vector<16x8xf32>, vector<16x8xf32> -> vector<16x8xf32>
    %84 = arith.addf %82, %83 : vector<16x8xf32>
    %85 = vector.extract_strided_slice %4 {offsets = [0, 24], sizes = [16, 8], strides = [1, 1]} : vector<16x96xf32> to vector<16x8xf32>
    %cst_28 = arith.constant 0.176776692 : f32
    %86 = vector.broadcast %cst_28 : f32 to vector<16x8xf32>
    %87 = arith.mulf %85, %86 : vector<16x8xf32>
    %88 = vector.extract_strided_slice %6 {offsets = [0, 56], sizes = [16, 8], strides = [1, 1]} : vector<16x96xf32> to vector<16x8xf32>
    %89 = vector.extract_strided_slice %6 {offsets = [0, 88], sizes = [16, 8], strides = [1, 1]} : vector<16x96xf32> to vector<16x8xf32>
    %cst_29 = arith.constant dense<0.000000e+00> : vector<16x16xf32>
    %90 = tpu.matmul %87, %88, %cst_29 {dimension_numbers = #tpu.dot_dimension_numbers<[1], [1], [0], [0], [0, 0, 1, 0], [], []>} : vector<16x8xf32>, vector<16x8xf32>, vector<16x16xf32> -> vector<16x16xf32>
    %91 = vector.extract_strided_slice %7 {offsets = [0, 3], sizes = [16, 1], strides = [1, 1]} : vector<16x4xf32> to vector<16x1xf32>
    %cst_30 = arith.constant dense<0xFF800000> : vector<16xf32>
    %92 = vector.multi_reduction <maximumf>, %90, %cst_30 [1] : vector<16x16xf32> to vector<16xf32>
    %93 = vector.shape_cast %92 : vector<16xf32> to vector<16x1xf32>
    %94 = arith.maximumf %91, %93 : vector<16x1xf32>
    %95 = arith.subf %91, %94 : vector<16x1xf32>
    %96 = math.exp %95 : vector<16x1xf32>
    %97 = vector.broadcast %94 : vector<16x1xf32> to vector<16x16xf32>
    %98 = arith.subf %90, %97 : vector<16x16xf32>
    %99 = math.exp %98 : vector<16x16xf32>
    %100 = vector.extract_strided_slice %8 {offsets = [0, 3], sizes = [16, 1], strides = [1, 1]} : vector<16x4xf32> to vector<16x1xf32>
    %101 = arith.mulf %96, %100 : vector<16x1xf32>
    %cst_31 = arith.constant dense<0.000000e+00> : vector<16xf32>
    %102 = vector.multi_reduction <add>, %99, %cst_31 [1] : vector<16x16xf32> to vector<16xf32>
    %103 = vector.shape_cast %102 : vector<16xf32> to vector<16x1xf32>
    %104 = arith.addf %101, %103 : vector<16x1xf32>
    %105 = vector.extract_strided_slice %9 {offsets = [0, 24], sizes = [16, 8], strides = [1, 1]} : vector<16x32xf32> to vector<16x8xf32>
    %106 = vector.broadcast %96 : vector<16x1xf32> to vector<16x8xf32>
    %107 = arith.mulf %106, %105 : vector<16x8xf32>
    %cst_32 = arith.constant dense<0.000000e+00> : vector<16x8xf32>
    %108 = tpu.matmul %99, %89, %cst_32 {dimension_numbers = #tpu.dot_dimension_numbers<[1], [0], [0], [1], [0, 0, 1, 1], [], []>} : vector<16x16xf32>, vector<16x8xf32>, vector<16x8xf32> -> vector<16x8xf32>
    %109 = arith.addf %107, %108 : vector<16x8xf32>
    %110 = tpu.concatenate %19, %44, %69, %94 in 1 : vector<16x1xf32>, vector<16x1xf32>, vector<16x1xf32>, vector<16x1xf32> -> vector<16x4xf32>
    %c0_33 = arith.constant 0 : index
    %c0_34 = arith.constant 0 : index
    %111 = vector.load %arg7[%c0_33, %c0_34] : memref<16x4xf32, #tpu.memory_space<vmem>>, vector<16x4xf32>
    tpu.vector_store %arg7[%c0_33, %c0_34], %110 {strides = array<i32>} : memref<16x4xf32, #tpu.memory_space<vmem>>, vector<16x4xf32>,
    %112 = tpu.concatenate %29, %54, %79, %104 in 1 : vector<16x1xf32>, vector<16x1xf32>, vector<16x1xf32>, vector<16x1xf32> -> vector<16x4xf32>
    %c0_35 = arith.constant 0 : index
    %c0_36 = arith.constant 0 : index
    %113 = vector.load %arg8[%c0_35, %c0_36] : memref<16x4xf32, #tpu.memory_space<vmem>>, vector<16x4xf32>
    tpu.vector_store %arg8[%c0_35, %c0_36], %112 {strides = array<i32>} : memref<16x4xf32, #tpu.memory_space<vmem>>, vector<16x4xf32>,
    %114 = tpu.concatenate %34, %59, %84, %109 in 1 : vector<16x8xf32>, vector<16x8xf32>, vector<16x8xf32>, vector<16x8xf32> -> vector<16x32xf32>
    %c0_37 = arith.constant 0 : index
    %c0_38 = arith.constant 0 : index
    %115 = vector.load %arg9[%c0_37, %c0_38] : memref<16x32xf32, #tpu.memory_space<vmem>>, vector<16x32xf32>
    tpu.vector_store %arg9[%c0_37, %c0_38], %114 {strides = array<i32>} : memref<16x32xf32, #tpu.memory_space<vmem>>, vector<16x32xf32>,
    %c1_i32 = arith.constant 1 : i32
    %116 = arith.cmpi eq, %arg2, %c1_i32 : i32
    %117 = arith.extui %116 : i1 to i32
    %c0_i32_39 = arith.constant 0 : i32
    %118 = arith.cmpi ne, %117, %c0_i32_39 : i32
    scf.if %118 {
      %c0_40 = arith.constant 0 : index
      %c0_41 = arith.constant 0 : index
      %119 = vector.load %arg8[%c0_40, %c0_41] : memref<16x4xf32, #tpu.memory_space<vmem>>, vector<16x4xf32>
      %120 = tpu.reciprocal %119 {approx = true} : vector<16x4xf32> -> vector<16x4xf32>
      %c0_42 = arith.constant 0 : index
      %c0_43 = arith.constant 0 : index
      %121 = vector.load %arg9[%c0_42, %c0_43] : memref<16x32xf32, #tpu.memory_space<vmem>>, vector<16x32xf32>
      %122 = vector.extract_strided_slice %121 {offsets = [0, 0], sizes = [16, 8], strides = [1, 1]} : vector<16x32xf32> to vector<16x8xf32>
      %123 = vector.extract_strided_slice %120 {offsets = [0, 0], sizes = [16, 1], strides = [1, 1]} : vector<16x4xf32> to vector<16x1xf32>
      %124 = vector.broadcast %123 : vector<16x1xf32> to vector<16x8xf32>
      %125 = arith.mulf %122, %124 : vector<16x8xf32>
      %126 = vector.extract_strided_slice %121 {offsets = [0, 8], sizes = [16, 8], strides = [1, 1]} : vector<16x32xf32> to vector<16x8xf32>
      %127 = vector.extract_strided_slice %120 {offsets = [0, 1], sizes = [16, 1], strides = [1, 1]} : vector<16x4xf32> to vector<16x1xf32>
      %128 = vector.broadcast %127 : vector<16x1xf32> to vector<16x8xf32>
      %129 = arith.mulf %126, %128 : vector<16x8xf32>
      %130 = vector.extract_strided_slice %121 {offsets = [0, 16], sizes = [16, 8], strides = [1, 1]} : vector<16x32xf32> to vector<16x8xf32>
      %131 = vector.extract_strided_slice %120 {offsets = [0, 2], sizes = [16, 1], strides = [1, 1]} : vector<16x4xf32> to vector<16x1xf32>
      %132 = vector.broadcast %131 : vector<16x1xf32> to vector<16x8xf32>
      %133 = arith.mulf %130, %132 : vector<16x8xf32>
      %134 = vector.extract_strided_slice %121 {offsets = [0, 24], sizes = [16, 8], strides = [1, 1]} : vector<16x32xf32> to vector<16x8xf32>
      %135 = vector.extract_strided_slice %120 {offsets = [0, 3], sizes = [16, 1], strides = [1, 1]} : vector<16x4xf32> to vector<16x1xf32>
      %136 = vector.broadcast %135 : vector<16x1xf32> to vector<16x8xf32>
      %137 = arith.mulf %134, %136 : vector<16x8xf32>
      %138 = tpu.concatenate %125, %129, %133, %137 in 1 : vector<16x8xf32>, vector<16x8xf32>, vector<16x8xf32>, vector<16x8xf32> -> vector<16x32xf32>
      %c0_44 = arith.constant 0 : index
      %c0_45 = arith.constant 0 : index
      %c0_46 = arith.constant 0 : index
      %c0_47 = arith.constant 0 : index
      %139 = vector.load %arg6[%c0_44, %c0_45, %c0_46, %c0_47] : memref<1x1x16x32xf32, #tpu.memory_space<vmem>>, vector<1x1x16x32xf32>
      %140 = vector.shape_cast %139 : vector<1x1x16x32xf32> to vector<16x32xf32>
      %141 = vector.shape_cast %138 : vector<16x32xf32> to vector<1x1x16x32xf32>
      tpu.vector_store %arg6[%c0_44, %c0_45, %c0_46, %c0_47], %141 {strides = array<i32>} : memref<1x1x16x32xf32, #tpu.memory_space<vmem>>, vector<1x1x16x32xf32>,
    } else {
    }
    return
  }
  func.func @transform_0(%arg0: i32, %arg1: i32, %arg2: i32, %arg3: memref<16xi32, #tpu.memory_space<smem>>) -> (i32, i32, i32, i32) {
    %c0_i32 = arith.constant 0 : i32
    %c0_i32_0 = arith.constant 0 : i32
    %c0_i32_1 = arith.constant 0 : i32
    return %arg0, %arg1, %c0_i32, %c0_i32_0 : i32, i32, i32, i32
  }
  func.func @transform_1(%arg0: i32, %arg1: i32, %arg2: i32, %arg3: memref<16xi32, #tpu.memory_space<smem>>) -> (i32, i32, i32, i32) {
    %c4_i32 = arith.constant 4 : i32
    %0 = arith.muli %arg0, %c4_i32 : i32
    %1 = arith.addi %0, %arg1 : i32
    %c2_i32 = arith.constant 2 : i32
    %2 = arith.muli %1, %c2_i32 : i32
    %3 = arith.addi %2, %arg2 : i32
    %4 = arith.index_cast %3 : i32 to index
    %5 = memref.load %arg3[%4] : memref<16xi32, #tpu.memory_space<smem>>
    %c0_i32 = arith.constant 0 : i32
    %c0_i32_0 = arith.constant 0 : i32
    %c0_i32_1 = arith.constant 0 : i32
    return %arg0, %5, %c0_i32, %c0_i32_0 : i32, i32, i32, i32
  }
  func.func @transform_2(%arg0: i32, %arg1: i32, %arg2: i32, %arg3: memref<16xi32, #tpu.memory_space<smem>>) -> (i32, i32, i32, i32) {
    %c0_i32 = arith.constant 0 : i32
    %c0_i32_0 = arith.constant 0 : i32
    %c0_i32_1 = arith.constant 0 : i32
    return %arg0, %arg1, %c0_i32, %c0_i32_0 : i32, i32, i32, i32
  }
}

module attributes {stable_mosaic.version = 11 : i64} {
  func.func @_sum_proj_kernel(%arg0: i32, %arg1: memref<128x32xf32, #tpu.memory_space<vmem>>, %arg2: memref<128x32xf32, #tpu.memory_space<vmem>>, %arg3: memref<128x32xf32, #tpu.memory_space<vmem>>, %arg4: memref<32x32xf32, #tpu.memory_space<vmem>>, %arg5: memref<1x32xf32, #tpu.memory_space<vmem>>, %arg6: memref<128x32xf32, #tpu.memory_space<vmem>>) attributes {dimension_semantics = [#tpu.dimension_semantics<parallel>], iteration_bounds = array<i64: 1>, scalar_prefetch = 0 : i64, scratch_operands = 0 : i64, tpu.core_type = #tpu.core_type<tc>, window_params = [{transform_indices = @transform_0, window_bounds = array<i64: 128, 32>}, {transform_indices = @transform_1, window_bounds = array<i64: 128, 32>}, {transform_indices = @transform_2, window_bounds = array<i64: 128, 32>}, {pipeline_mode = #tpu.pipeline_mode<synchronous>, transform_indices = @transform_3, window_bounds = array<i64: 32, 32>}, {pipeline_mode = #tpu.pipeline_mode<synchronous>, transform_indices = @transform_4, window_bounds = array<i64: 1, 32>}, {transform_indices = @transform_5, window_bounds = array<i64: 128, 32>}]} {
    %c0 = arith.constant 0 : index
    %c0_0 = arith.constant 0 : index
    %0 = vector.load %arg1[%c0, %c0_0] : memref<128x32xf32, #tpu.memory_space<vmem>>, vector<128x32xf32>
    %c0_1 = arith.constant 0 : index
    %c0_2 = arith.constant 0 : index
    %1 = vector.load %arg2[%c0_1, %c0_2] : memref<128x32xf32, #tpu.memory_space<vmem>>, vector<128x32xf32>
    %2 = arith.addf %0, %1 : vector<128x32xf32>
    %c0_3 = arith.constant 0 : index
    %c0_4 = arith.constant 0 : index
    %3 = vector.load %arg3[%c0_3, %c0_4] : memref<128x32xf32, #tpu.memory_space<vmem>>, vector<128x32xf32>
    %cst = arith.constant 2.000000e+00 : f32
    %4 = vector.broadcast %cst : f32 to vector<128x32xf32>
    %5 = arith.mulf %4, %3 : vector<128x32xf32>
    %6 = arith.addf %2, %5 : vector<128x32xf32>
    %c0_5 = arith.constant 0 : index
    %c0_6 = arith.constant 0 : index
    %7 = vector.load %arg4[%c0_5, %c0_6] : memref<32x32xf32, #tpu.memory_space<vmem>>, vector<32x32xf32>
    %cst_7 = arith.constant dense<0.000000e+00> : vector<128x32xf32>
    %8 = tpu.matmul %6, %7, %cst_7 {dimension_numbers = #tpu.dot_dimension_numbers<[1], [0], [0], [1], [0, 0, 1, 1], [], []>} : vector<128x32xf32>, vector<32x32xf32>, vector<128x32xf32> -> vector<128x32xf32>
    %c0_8 = arith.constant 0 : index
    %c0_9 = arith.constant 0 : index
    %9 = vector.load %arg5[%c0_8, %c0_9] : memref<1x32xf32, #tpu.memory_space<vmem>>, vector<1x32xf32>
    %cst_10 = arith.constant 2.000000e+00 : f32
    %10 = vector.broadcast %cst_10 : f32 to vector<1x32xf32>
    %11 = arith.mulf %10, %9 : vector<1x32xf32>
    %12 = vector.broadcast %11 : vector<1x32xf32> to vector<128x32xf32>
    %13 = arith.addf %8, %12 : vector<128x32xf32>
    %c0_11 = arith.constant 0 : index
    %c0_12 = arith.constant 0 : index
    %14 = vector.load %arg6[%c0_11, %c0_12] : memref<128x32xf32, #tpu.memory_space<vmem>>, vector<128x32xf32>
    tpu.vector_store %arg6[%c0_11, %c0_12], %13 {strides = array<i32>} : memref<128x32xf32, #tpu.memory_space<vmem>>, vector<128x32xf32>,
    return
  }
  func.func @transform_0(%arg0: i32) -> (i32, i32) {
    %c0_i32 = arith.constant 0 : i32
    %c0_i32_0 = arith.constant 0 : i32
    return %arg0, %c0_i32 : i32, i32
  }
  func.func @transform_1(%arg0: i32) -> (i32, i32) {
    %c0_i32 = arith.constant 0 : i32
    %c0_i32_0 = arith.constant 0 : i32
    return %arg0, %c0_i32 : i32, i32
  }
  func.func @transform_2(%arg0: i32) -> (i32, i32) {
    %c0_i32 = arith.constant 0 : i32
    %c0_i32_0 = arith.constant 0 : i32
    return %arg0, %c0_i32 : i32, i32
  }
  func.func @transform_3(%arg0: i32) -> (i32, i32) {
    %c0_i32 = arith.constant 0 : i32
    %c0_i32_0 = arith.constant 0 : i32
    %c0_i32_1 = arith.constant 0 : i32
    return %c0_i32, %c0_i32_0 : i32, i32
  }
  func.func @transform_4(%arg0: i32) -> (i32, i32) {
    %c0_i32 = arith.constant 0 : i32
    %c0_i32_0 = arith.constant 0 : i32
    %c0_i32_1 = arith.constant 0 : i32
    return %c0_i32, %c0_i32_0 : i32, i32
  }
  func.func @transform_5(%arg0: i32) -> (i32, i32) {
    %c0_i32 = arith.constant 0 : i32
    %c0_i32_0 = arith.constant 0 : i32
    return %arg0, %c0_i32 : i32, i32
  }
}

module attributes {stable_mosaic.version = 11 : i64} {
  func.func @_dwconv3x3_kernel(%arg0: i32, %arg1: memref<1x10x10x32xf32, #tpu.memory_space<vmem>>, %arg2: memref<3x3x32xf32, #tpu.memory_space<vmem>>, %arg3: memref<1x32xf32, #tpu.memory_space<vmem>>, %arg4: memref<1x8x8x32xf32, #tpu.memory_space<vmem>>) attributes {dimension_semantics = [#tpu.dimension_semantics<parallel>], iteration_bounds = array<i64: 2>, scalar_prefetch = 0 : i64, scratch_operands = 0 : i64, tpu.core_type = #tpu.core_type<tc>, window_params = [{transform_indices = @transform_0, window_bounds = array<i64: 1, 10, 10, 32>}, {pipeline_mode = #tpu.pipeline_mode<synchronous>, transform_indices = @transform_1, window_bounds = array<i64: 3, 3, 32>}, {pipeline_mode = #tpu.pipeline_mode<synchronous>, transform_indices = @transform_2, window_bounds = array<i64: 1, 32>}, {transform_indices = @transform_3, window_bounds = array<i64: 1, 8, 8, 32>}]} {
    %c0 = arith.constant 0 : index
    %c0_0 = arith.constant 0 : index
    %c0_1 = arith.constant 0 : index
    %0 = vector.load %arg2[%c0, %c0_0, %c0_1] : memref<3x3x32xf32, #tpu.memory_space<vmem>>, vector<3x3x32xf32>
    %cst = arith.constant 0.000000e+00 : f32
    %1 = vector.broadcast %cst : f32 to vector<8x8x32xf32>
    %c0_2 = arith.constant 0 : index
    %c0_3 = arith.constant 0 : index
    %c0_4 = arith.constant 0 : index
    %c0_5 = arith.constant 0 : index
    %2 = vector.load %arg1[%c0_2, %c0_3, %c0_4, %c0_5] : memref<1x10x10x32xf32, #tpu.memory_space<vmem>>, vector<1x8x8x32xf32>
    %3 = vector.shape_cast %2 : vector<1x8x8x32xf32> to vector<8x8x32xf32>
    %4 = vector.extract_strided_slice %0 {offsets = [0, 0, 0], sizes = [1, 1, 32], strides = [1, 1, 1]} : vector<3x3x32xf32> to vector<1x1x32xf32>
    %5 = vector.shape_cast %4 : vector<1x1x32xf32> to vector<32xf32>
    %6 = vector.shape_cast %5 : vector<32xf32> to vector<1x1x32xf32>
    %7 = vector.broadcast %6 : vector<1x1x32xf32> to vector<8x8x32xf32>
    %8 = arith.mulf %3, %7 : vector<8x8x32xf32>
    %9 = arith.addf %1, %8 : vector<8x8x32xf32>
    %c0_6 = arith.constant 0 : index
    %c0_7 = arith.constant 0 : index
    %c1 = arith.constant 1 : index
    %c0_8 = arith.constant 0 : index
    %10 = vector.load %arg1[%c0_6, %c0_7, %c1, %c0_8] : memref<1x10x10x32xf32, #tpu.memory_space<vmem>>, vector<1x8x8x32xf32>
    %11 = vector.shape_cast %10 : vector<1x8x8x32xf32> to vector<8x8x32xf32>
    %12 = vector.extract_strided_slice %0 {offsets = [0, 1, 0], sizes = [1, 1, 32], strides = [1, 1, 1]} : vector<3x3x32xf32> to vector<1x1x32xf32>
    %13 = vector.shape_cast %12 : vector<1x1x32xf32> to vector<32xf32>
    %14 = vector.shape_cast %13 : vector<32xf32> to vector<1x1x32xf32>
    %15 = vector.broadcast %14 : vector<1x1x32xf32> to vector<8x8x32xf32>
    %16 = arith.mulf %11, %15 : vector<8x8x32xf32>
    %17 = arith.addf %9, %16 : vector<8x8x32xf32>
    %c0_9 = arith.constant 0 : index
    %c0_10 = arith.constant 0 : index
    %c2 = arith.constant 2 : index
    %c0_11 = arith.constant 0 : index
    %18 = vector.load %arg1[%c0_9, %c0_10, %c2, %c0_11] : memref<1x10x10x32xf32, #tpu.memory_space<vmem>>, vector<1x8x8x32xf32>
    %19 = vector.shape_cast %18 : vector<1x8x8x32xf32> to vector<8x8x32xf32>
    %20 = vector.extract_strided_slice %0 {offsets = [0, 2, 0], sizes = [1, 1, 32], strides = [1, 1, 1]} : vector<3x3x32xf32> to vector<1x1x32xf32>
    %21 = vector.shape_cast %20 : vector<1x1x32xf32> to vector<32xf32>
    %22 = vector.shape_cast %21 : vector<32xf32> to vector<1x1x32xf32>
    %23 = vector.broadcast %22 : vector<1x1x32xf32> to vector<8x8x32xf32>
    %24 = arith.mulf %19, %23 : vector<8x8x32xf32>
    %25 = arith.addf %17, %24 : vector<8x8x32xf32>
    %c0_12 = arith.constant 0 : index
    %c1_13 = arith.constant 1 : index
    %c0_14 = arith.constant 0 : index
    %c0_15 = arith.constant 0 : index
    %26 = vector.load %arg1[%c0_12, %c1_13, %c0_14, %c0_15] : memref<1x10x10x32xf32, #tpu.memory_space<vmem>>, vector<1x8x8x32xf32>
    %27 = vector.shape_cast %26 : vector<1x8x8x32xf32> to vector<8x8x32xf32>
    %28 = vector.extract_strided_slice %0 {offsets = [1, 0, 0], sizes = [1, 1, 32], strides = [1, 1, 1]} : vector<3x3x32xf32> to vector<1x1x32xf32>
    %29 = vector.shape_cast %28 : vector<1x1x32xf32> to vector<32xf32>
    %30 = vector.shape_cast %29 : vector<32xf32> to vector<1x1x32xf32>
    %31 = vector.broadcast %30 : vector<1x1x32xf32> to vector<8x8x32xf32>
    %32 = arith.mulf %27, %31 : vector<8x8x32xf32>
    %33 = arith.addf %25, %32 : vector<8x8x32xf32>
    %c0_16 = arith.constant 0 : index
    %c1_17 = arith.constant 1 : index
    %c1_18 = arith.constant 1 : index
    %c0_19 = arith.constant 0 : index
    %34 = vector.load %arg1[%c0_16, %c1_17, %c1_18, %c0_19] : memref<1x10x10x32xf32, #tpu.memory_space<vmem>>, vector<1x8x8x32xf32>
    %35 = vector.shape_cast %34 : vector<1x8x8x32xf32> to vector<8x8x32xf32>
    %36 = vector.extract_strided_slice %0 {offsets = [1, 1, 0], sizes = [1, 1, 32], strides = [1, 1, 1]} : vector<3x3x32xf32> to vector<1x1x32xf32>
    %37 = vector.shape_cast %36 : vector<1x1x32xf32> to vector<32xf32>
    %38 = vector.shape_cast %37 : vector<32xf32> to vector<1x1x32xf32>
    %39 = vector.broadcast %38 : vector<1x1x32xf32> to vector<8x8x32xf32>
    %40 = arith.mulf %35, %39 : vector<8x8x32xf32>
    %41 = arith.addf %33, %40 : vector<8x8x32xf32>
    %c0_20 = arith.constant 0 : index
    %c1_21 = arith.constant 1 : index
    %c2_22 = arith.constant 2 : index
    %c0_23 = arith.constant 0 : index
    %42 = vector.load %arg1[%c0_20, %c1_21, %c2_22, %c0_23] : memref<1x10x10x32xf32, #tpu.memory_space<vmem>>, vector<1x8x8x32xf32>
    %43 = vector.shape_cast %42 : vector<1x8x8x32xf32> to vector<8x8x32xf32>
    %44 = vector.extract_strided_slice %0 {offsets = [1, 2, 0], sizes = [1, 1, 32], strides = [1, 1, 1]} : vector<3x3x32xf32> to vector<1x1x32xf32>
    %45 = vector.shape_cast %44 : vector<1x1x32xf32> to vector<32xf32>
    %46 = vector.shape_cast %45 : vector<32xf32> to vector<1x1x32xf32>
    %47 = vector.broadcast %46 : vector<1x1x32xf32> to vector<8x8x32xf32>
    %48 = arith.mulf %43, %47 : vector<8x8x32xf32>
    %49 = arith.addf %41, %48 : vector<8x8x32xf32>
    %c0_24 = arith.constant 0 : index
    %c2_25 = arith.constant 2 : index
    %c0_26 = arith.constant 0 : index
    %c0_27 = arith.constant 0 : index
    %50 = vector.load %arg1[%c0_24, %c2_25, %c0_26, %c0_27] : memref<1x10x10x32xf32, #tpu.memory_space<vmem>>, vector<1x8x8x32xf32>
    %51 = vector.shape_cast %50 : vector<1x8x8x32xf32> to vector<8x8x32xf32>
    %52 = vector.extract_strided_slice %0 {offsets = [2, 0, 0], sizes = [1, 1, 32], strides = [1, 1, 1]} : vector<3x3x32xf32> to vector<1x1x32xf32>
    %53 = vector.shape_cast %52 : vector<1x1x32xf32> to vector<32xf32>
    %54 = vector.shape_cast %53 : vector<32xf32> to vector<1x1x32xf32>
    %55 = vector.broadcast %54 : vector<1x1x32xf32> to vector<8x8x32xf32>
    %56 = arith.mulf %51, %55 : vector<8x8x32xf32>
    %57 = arith.addf %49, %56 : vector<8x8x32xf32>
    %c0_28 = arith.constant 0 : index
    %c2_29 = arith.constant 2 : index
    %c1_30 = arith.constant 1 : index
    %c0_31 = arith.constant 0 : index
    %58 = vector.load %arg1[%c0_28, %c2_29, %c1_30, %c0_31] : memref<1x10x10x32xf32, #tpu.memory_space<vmem>>, vector<1x8x8x32xf32>
    %59 = vector.shape_cast %58 : vector<1x8x8x32xf32> to vector<8x8x32xf32>
    %60 = vector.extract_strided_slice %0 {offsets = [2, 1, 0], sizes = [1, 1, 32], strides = [1, 1, 1]} : vector<3x3x32xf32> to vector<1x1x32xf32>
    %61 = vector.shape_cast %60 : vector<1x1x32xf32> to vector<32xf32>
    %62 = vector.shape_cast %61 : vector<32xf32> to vector<1x1x32xf32>
    %63 = vector.broadcast %62 : vector<1x1x32xf32> to vector<8x8x32xf32>
    %64 = arith.mulf %59, %63 : vector<8x8x32xf32>
    %65 = arith.addf %57, %64 : vector<8x8x32xf32>
    %c0_32 = arith.constant 0 : index
    %c2_33 = arith.constant 2 : index
    %c2_34 = arith.constant 2 : index
    %c0_35 = arith.constant 0 : index
    %66 = vector.load %arg1[%c0_32, %c2_33, %c2_34, %c0_35] : memref<1x10x10x32xf32, #tpu.memory_space<vmem>>, vector<1x8x8x32xf32>
    %67 = vector.shape_cast %66 : vector<1x8x8x32xf32> to vector<8x8x32xf32>
    %68 = vector.extract_strided_slice %0 {offsets = [2, 2, 0], sizes = [1, 1, 32], strides = [1, 1, 1]} : vector<3x3x32xf32> to vector<1x1x32xf32>
    %69 = vector.shape_cast %68 : vector<1x1x32xf32> to vector<32xf32>
    %70 = vector.shape_cast %69 : vector<32xf32> to vector<1x1x32xf32>
    %71 = vector.broadcast %70 : vector<1x1x32xf32> to vector<8x8x32xf32>
    %72 = arith.mulf %67, %71 : vector<8x8x32xf32>
    %73 = arith.addf %65, %72 : vector<8x8x32xf32>
    %c0_36 = arith.constant 0 : index
    %c0_37 = arith.constant 0 : index
    %74 = vector.load %arg3[%c0_36, %c0_37] : memref<1x32xf32, #tpu.memory_space<vmem>>, vector<1x32xf32>
    %75 = vector.shape_cast %74 : vector<1x32xf32> to vector<1x1x32xf32>
    %76 = vector.broadcast %75 : vector<1x1x32xf32> to vector<8x8x32xf32>
    %77 = arith.addf %73, %76 : vector<8x8x32xf32>
    %c0_38 = arith.constant 0 : index
    %c0_39 = arith.constant 0 : index
    %c0_40 = arith.constant 0 : index
    %c0_41 = arith.constant 0 : index
    %78 = vector.load %arg4[%c0_38, %c0_39, %c0_40, %c0_41] : memref<1x8x8x32xf32, #tpu.memory_space<vmem>>, vector<1x8x8x32xf32>
    %79 = vector.shape_cast %78 : vector<1x8x8x32xf32> to vector<8x8x32xf32>
    %80 = vector.shape_cast %77 : vector<8x8x32xf32> to vector<1x8x8x32xf32>
    tpu.vector_store %arg4[%c0_38, %c0_39, %c0_40, %c0_41], %80 {strides = array<i32>} : memref<1x8x8x32xf32, #tpu.memory_space<vmem>>, vector<1x8x8x32xf32>,
    return
  }
  func.func @transform_0(%arg0: i32) -> (i32, i32, i32, i32) {
    %c0_i32 = arith.constant 0 : i32
    %c0_i32_0 = arith.constant 0 : i32
    %c0_i32_1 = arith.constant 0 : i32
    %c0_i32_2 = arith.constant 0 : i32
    return %arg0, %c0_i32, %c0_i32_0, %c0_i32_1 : i32, i32, i32, i32
  }
  func.func @transform_1(%arg0: i32) -> (i32, i32, i32) {
    %c0_i32 = arith.constant 0 : i32
    %c0_i32_0 = arith.constant 0 : i32
    %c0_i32_1 = arith.constant 0 : i32
    %c0_i32_2 = arith.constant 0 : i32
    return %c0_i32, %c0_i32_0, %c0_i32_1 : i32, i32, i32
  }
  func.func @transform_2(%arg0: i32) -> (i32, i32) {
    %c0_i32 = arith.constant 0 : i32
    %c0_i32_0 = arith.constant 0 : i32
    %c0_i32_1 = arith.constant 0 : i32
    return %c0_i32, %c0_i32_0 : i32, i32
  }
  func.func @transform_3(%arg0: i32) -> (i32, i32, i32, i32) {
    %c0_i32 = arith.constant 0 : i32
    %c0_i32_0 = arith.constant 0 : i32
    %c0_i32_1 = arith.constant 0 : i32
    %c0_i32_2 = arith.constant 0 : i32
    return %arg0, %c0_i32, %c0_i32_0, %c0_i32_1 : i32, i32, i32, i32
  }
}

</mosaic_0001>

<llo_original>
// kernel: ar_attention_pallas.9
$region0: #{ar_attention_pallas.9}
  #allocation0 [shape = 'u32[]', space=smem, size = 0x4, offset = 0x4, fixed_abs, tag = 'smem constant byte address 0x4 - core index']
  #allocation1 [shape = 'u32[72,128]{1,0:T(1,128)}', space=vmem, size = 0x9000, scoped, tag = 'internal scratch']
  %s0 = inlined_call_operand.vmem [shape: f32[2,4,32], index: 0, kind: input, shape index: {}]
  %s1 = inlined_call_operand.vmem [shape: f32[2,4,32], index: 1, kind: input, shape index: {}]
  %s2 = inlined_call_operand.vmem [shape: f32[2,4,4], index: 2, kind: output, shape index: {}]
  %s3 = sld [smem:[#allocation0]]
  $region41: #{ar_attention_pallas.9} parent=0
    _
  %s5 = ssub.s32 1, %s3
  %s6 = scalar_select 0, %s5, %s3
  loop: start=0, step=1, limit=4
  $region2: #{ar_attention_pallas.9} parent=0 // loop_pre_header
    _
  $region3: #{ar_attention_pallas.9} parent=0 // loop_header
    %s8 = sphi 0, %s12
    %p9 = scmp.ge.s32.totalorder %s8, 4
    %s18 = sphi 0, %s20
    %s21 = sphi 0, %s18
    %s22 = sphi 0, %s21
    %s38 = sphi 0, %s22
    %s44 = sphi 0, %s46
    %s47 = sphi 0, %s44
    %s48 = sphi 0, %s47
    %s64 = sphi 0, %s48
    %s70 = sphi 0, %s72
    %s73 = sphi 0, %s70
    %s74 = sphi 0, %s73
    %s90 = sphi 0, %s74
  $region4: #{ar_attention_pallas.9} parent=0 // loop_header_branch
    %11 = sbr.rel (%p9) target = $region8
  $region5: #{ar_attention_pallas.9} parent=0 // loop_body
    %s13 = ssub.s32 %s8, 1
    %s14 = ssub.s32 %s8, 2
    %s15 = sadd.s32 %s8, 1
    %s16 = ssub.s32 %s8, %s15
    %p17 = scmp.eq.s32.totalorder %s16, 0
    %s19 = sadd.s32 %s18, 1
    %s20 = scalar_select %p17, %s18, %s19
    %p23 = pneg %p17
    %p24 = scmp.eq.s32.totalorder %s8, 1
    %p25 = por %p23, %p24
    %p26 = scmp.ne.s32.totalorder %s18, %s21
    %p27 = scmp.eq.s32.totalorder %s8, 0
    %p28 = por %p26, %p27
    %p29 = scmp.ne.s32.totalorder %s18, %s21
    %p30 = scmp.eq.s32.totalorder %s13, 1
    %p31 = por %p29, %p30
    %p32 = scmp.ne.s32.totalorder %s21, %s22
    %p33 = scmp.eq.s32.totalorder %s13, 0
    %p34 = por %p32, %p33
    %p35 = scmp.ne.s32.totalorder %s21, %s22
    %p36 = scmp.eq.s32.totalorder %s14, 1
    %p37 = por %p35, %p36
    %p39 = scmp.ne.s32.totalorder %s22, %s38
    %p40 = scmp.eq.s32.totalorder %s14, 0
    %p41 = por %p39, %p40
    %s42 = ssub.s32 %s8, %s15
    %p43 = scmp.eq.s32.totalorder %s42, 0
    %s45 = sadd.s32 %s44, 1
    %s46 = scalar_select %p43, %s44, %s45
    %p49 = pneg %p43
    %p50 = scmp.eq.s32.totalorder %s8, 1
    %p51 = por %p49, %p50
    %p52 = scmp.ne.s32.totalorder %s44, %s47
    %p53 = scmp.eq.s32.totalorder %s8, 0
    %p54 = por %p52, %p53
    %p55 = scmp.ne.s32.totalorder %s44, %s47
    %p56 = scmp.eq.s32.totalorder %s13, 1
    %p57 = por %p55, %p56
    %p58 = scmp.ne.s32.totalorder %s47, %s48
    %p59 = scmp.eq.s32.totalorder %s13, 0
    %p60 = por %p58, %p59
    %p61 = scmp.ne.s32.totalorder %s47, %s48
    %p62 = scmp.eq.s32.totalorder %s14, 1
    %p63 = por %p61, %p62
    %p65 = scmp.ne.s32.totalorder %s48, %s64
    %p66 = scmp.eq.s32.totalorder %s14, 0
    %p67 = por %p65, %p66
    %s68 = ssub.s32 %s8, %s15
    %p69 = scmp.eq.s32.totalorder %s68, 0
    %s71 = sadd.s32 %s70, 1
    %s72 = scalar_select %p69, %s70, %s71
    %p75 = pneg %p69
    %p76 = scmp.eq.s32.totalorder %s8, 1
    %p77 = por %p75, %p76
    %p78 = scmp.ne.s32.totalorder %s70, %s73
    %p79 = scmp.eq.s32.totalorder %s8, 0
    %p80 = por %p78, %p79
    %p81 = scmp.ne.s32.totalorder %s70, %s73
    %p82 = scmp.eq.s32.totalorder %s13, 1
    %p83 = por %p81, %p82
    %p84 = scmp.ne.s32.totalorder %s73, %s74
    %p85 = scmp.eq.s32.totalorder %s13, 0
    %p86 = por %p84, %p85
    %p87 = scmp.ne.s32.totalorder %s73, %s74
    %p88 = scmp.eq.s32.totalorder %s14, 1
    %p89 = por %p87, %p88
    %p91 = scmp.ne.s32.totalorder %s74, %s90
    %p92 = scmp.eq.s32.totalorder %s14, 0
    %p93 = por %p91, %p92
    %p94 = scmp.le.s32.totalorder 1, %s8
    %p95 = scmp.lt.s32.totalorder %s8, 3
    %p96 = pnand %p94, %p95
    %p97 = pneg %p96
    // Predicated region
    $region9: #{ar_attention_pallas.9} parent=5 // pred_check
      _
    $region10: #{ar_attention_pallas.9} parent=5 // pred_check_branch
      %99 = sbr.rel (%p96) target = $region12
    $region11: #{ar_attention_pallas.9} parent=5 // pred_region
      %s100 = ssub.s32 %s8, 1
    $region12: #{ar_attention_pallas.9} parent=5 // pred_fallthru
      _
    %p101 = scmp.lt.s32.totalorder %s8, 2
    // Predicated region
    $region13: #{ar_attention_pallas.9} parent=5 // pred_check
      %p102 = pneg %p101
    $region14: #{ar_attention_pallas.9} parent=5 // pred_check_branch
      %104 = sbr.rel (%p102) target = $region16
    $region15: #{ar_attention_pallas.9} parent=5 // pred_region
      // Predicated region
      $region17: #{ar_attention_pallas.9} parent=15 // pred_check
        %p105 = pneg %p28
      $region18: #{ar_attention_pallas.9} parent=15 // pred_check_branch
        %107 = sbr.rel (%p105) target = $region20
      $region19: #{ar_attention_pallas.9} parent=15 // pred_region
        %p108 = scmp.lt.s32.totalorder %s8, 1
        %s109 = scalar_select %p108, %s8, 1
        %s110 = smul.addr %s109, 4
        %s111 = scalar_lea.vmem %s0, %s110
      $region20: #{ar_attention_pallas.9} parent=15 // pred_fallthru
        _
      // Predicated region
      $region21: #{ar_attention_pallas.9} parent=15 // pred_check
        %p112 = pneg %p54
      $region22: #{ar_attention_pallas.9} parent=15 // pred_check_branch
        %114 = sbr.rel (%p112) target = $region24
      $region23: #{ar_attention_pallas.9} parent=15 // pred_region
        %p115 = scmp.lt.s32.totalorder %s8, 1
        %s116 = scalar_select %p115, %s8, 1
        %s117 = smul.addr %s116, 4
        %s118 = scalar_lea.vmem %s1, %s117
      $region24: #{ar_attention_pallas.9} parent=15 // pred_fallthru
        _
    $region16: #{ar_attention_pallas.9} parent=5 // pred_fallthru
      _
    %p119 = scmp.le.s32.totalorder 1, %s8
    %p120 = scmp.lt.s32.totalorder %s8, 3
    %p121 = pnand %p119, %p120
    %p122 = pneg %p121
    // Predicated region
    $region25: #{ar_attention_pallas.9} parent=5 // pred_check
      _
    $region26: #{ar_attention_pallas.9} parent=5 // pred_check_branch
      %124 = sbr.rel (%p121) target = $region28
    $region27: #{ar_attention_pallas.9} parent=5 // pred_region
      %s125 = ssub.s32 %s8, 1
      %p126 = scmp.lt.s32.totalorder %s13, 1
      %s127 = scalar_select %p126, %s13, 1
      %s128 = smul.addr %s127, 4
      %s129 = scalar_lea.vmem %s0, %s128
      %p130 = pneg %p34
      %p131 = pneg %p31
      %p132 = scmp.lt.s32.totalorder %s13, 1
      %s133 = scalar_select %p132, %s13, 1
      %s134 = smul.addr %s133, 4
      %s135 = scalar_lea.vmem %s1, %s134
      %p136 = pneg %p60
      %p137 = pneg %p57
      %p138 = pneg %p86
      %p139 = pneg %p83
      %p140 = scmp.lt.s32.totalorder %s13, 1
      %s141 = scalar_select %p140, %s13, 1
      %s142 = smul.addr %s141, 4
      %s143 = scalar_lea.vmem %s2, %s142
      %p144 = scmp.lt.s32.totalorder %s13, 1
      %s145 = scalar_select %p144, %s13, 1
      %s146 = smul.addr %s145, 4
      %s147 = scalar_lea.vmem %s0, %s146
      %p148 = scmp.lt.s32.totalorder %s13, 1
      %s149 = scalar_select %p148, %s13, 1
      %s150 = smul.addr %s149, 4
      %s151 = scalar_lea.vmem %s1, %s150
      %p152 = scmp.lt.s32.totalorder %s13, 1
      %s153 = scalar_select %p152, %s13, 1
      %s154 = smul.addr %s153, 4
      %s155 = scalar_lea.vmem %s2, %s154
      %v156 = vld [vmem:[%s147] sm:$0xf]
      %v157 = vmul.f32 %v156, 0.17677669
      %v158 = vld [vmem:[%s151] sm:$0xf]
      %vm159 = vcmask 261120
      %v161 = vsel %vm159, %v157, 0
      %v164 = vsel %vm159, %v158, 0
      %166 = vmatpush.xpose.msra.mxu0 0.0
      %167 = vmatpush.xpose.msra.mxu0 0.0
      %168 = vmatpush.xpose.msra.mxu0 0.0
      %169 = vmatpush.xpose.msra.mxu0 0.0
      %170 = vmatpush.xpose.msra.mxu0 0.0
      %171 = vmatpush.xpose.msra.mxu0 0.0
      %172 = vmatpush.xpose.msra.mxu0 0.0
      %173 = vmatpush.xpose.msra.mxu0 0.0
      %174 = vmatpush.xpose.msra.mxu0 0.0
      %175 = vmatpush.xpose.msra.mxu0 0.0
      %176 = vmatpush.xpose.msra.mxu0 0.0
      %177 = vmatpush.xpose.msra.mxu0 0.0
      %178 = vmatpush.xpose.msra.mxu0 0.0
      %179 = vmatpush.xpose.msra.mxu0 0.0
      %180 = vmatpush.xpose.msra.mxu0 0.0
      %181 = vmatpush.xpose.msra.mxu0 %v164
      %182 = vmatmul.f32.gmra.mxu0 %v161
      %v183 = vpop.f32.mrf.mxu0
      %v184 = vadd.f32 0.0, %v183
      %185 = vdwg.mxu0
      %vm186 = vcmask 27648
      %187 = vst.msk [vmem:[%s155] sm:$0xf] %vm186, %v184
      %p188 = scmp.lt.s32.totalorder %s13, 1
      %s189 = scalar_select %p188, %s13, 1
      %s190 = smul.addr %s189, 4
      %s191 = scalar_lea.vmem %s2, %s190
      // Predicated region
      $region29: #{ar_attention_pallas.9} parent=27 // pred_check
        %p192 = pneg %p83
      $region30: #{ar_attention_pallas.9} parent=27 // pred_check_branch
        %194 = sbr.rel (%p192) target = $region32
      $region31: #{ar_attention_pallas.9} parent=27 // pred_region
        _
      $region32: #{ar_attention_pallas.9} parent=27 // pred_fallthru
        _
    $region28: #{ar_attention_pallas.9} parent=5 // pred_fallthru
      _
    %p195 = scmp.le.s32.totalorder 2, %s8
    // Predicated region
    $region33: #{ar_attention_pallas.9} parent=5 // pred_check
      %p196 = pneg %p195
    $region34: #{ar_attention_pallas.9} parent=5 // pred_check_branch
      %198 = sbr.rel (%p196) target = $region36
    $region35: #{ar_attention_pallas.9} parent=5 // pred_region
      %s199 = ssub.s32 %s8, 2
      // Predicated region
      $region37: #{ar_attention_pallas.9} parent=35 // pred_check
        %p200 = pneg %p89
      $region38: #{ar_attention_pallas.9} parent=35 // pred_check_branch
        %202 = sbr.rel (%p200) target = $region40
      $region39: #{ar_attention_pallas.9} parent=35 // pred_region
        %p203 = scmp.lt.s32.totalorder %s14, 1
        %s204 = scalar_select %p203, %s14, 1
        %s205 = smul.addr %s204, 4
        %s206 = scalar_lea.vmem %s2, %s205
      $region40: #{ar_attention_pallas.9} parent=35 // pred_fallthru
        _
    $region36: #{ar_attention_pallas.9} parent=5 // pred_fallthru
      _
  $region6: #{ar_attention_pallas.9} parent=0 // loop_footer
    %s12 = sadd.s32 1, %s8
  $region7: #{ar_attention_pallas.9} parent=0 // loop_footer_branch
    %7 = sbr.rel target = $region3
  $region8: #{ar_attention_pallas.9} parent=0 // loop_exit
    _

// kernel: ar_attention_pallas.7
$region0: #{ar_attention_pallas.7}
  #allocation0 [shape = 'u32[]', space=smem, size = 0x4, offset = 0x4, fixed_abs, tag = 'smem constant byte address 0x4 - core index']
  #allocation1 [shape = 'u32[72,128]{1,0:T(1,128)}', space=vmem, size = 0x9000, scoped, tag = 'internal scratch']
  %s0 = inlined_call_operand.hbm [shape: f32[128,32], index: 0, kind: input, shape index: {}]
  %s1 = inlined_call_operand.hbm [shape: f32[32,96], index: 1, kind: input, shape index: {}]
  %s2 = inlined_call_operand.vmem [shape: f32[1,96], index: 2, kind: input, shape index: {}]
  %s3 = inlined_call_operand.vmem [shape: f32[128,96], index: 3, kind: output, shape index: {}]
  %s4 = sld [smem:[#allocation0]]
  $region30: #{ar_attention_pallas.7} parent=0
    _
  %s6 = ssub.s32 1, %s4
  %s7 = scalar_select 0, %s6, %s4
  $region1: #{ar_attention_pallas.7} parent=0
    #allocation2 [shape = 'u8[65536]{0}', space=vmem, size = 0x10000, scoped, tag = 'input window, operand 0, single buffered']
    #allocation3 [shape = 's32[1]{0}', space=sflag, size = 0x4, scoped, tag = 'scoped memory for ar_attention_pallas.7']
    #allocation4 [shape = 'u8[16384]{0}', space=vmem, size = 0x4000, scoped, tag = 'input window, operand 1, single buffered']
    #allocation5 [shape = 's32[1]{0}', space=sflag, size = 0x4, scoped, tag = 'scoped memory for ar_attention_pallas.7']
    %8 = vsyncpa [#allocation3], 0
    %9 = vsyncpa [#allocation5], 0
    // Predicated region
    $region2: #{ar_attention_pallas.7} parent=1 // pred_check
      _
    $region3: #{ar_attention_pallas.7} parent=1 // pred_check_branch
      %11 = sbr.rel (0) target = $region5
    $region4: #{ar_attention_pallas.7} parent=1 // pred_region
      %13 = vsyncadd [#allocation3], 0
      %s14 = sshll.u32 %s0, 4
      %s15 = int_to_ptr.hbm [resolvable:$true] %s14
      %s16 = sshll.u32 [#allocation2], 4
      %s17 = int_to_ptr.vmem [resolvable:$true] %s16
      %22 = dma.hbm_to_vmem [thread:$0]  %s15, 2048, %s17, [#allocation3], 128, 128, 8
    $region5: #{ar_attention_pallas.7} parent=1 // pred_fallthru
      _
    // Predicated region
    $region6: #{ar_attention_pallas.7} parent=1 // pred_check
      _
    $region7: #{ar_attention_pallas.7} parent=1 // pred_check_branch
      %24 = sbr.rel (0) target = $region9
    $region8: #{ar_attention_pallas.7} parent=1 // pred_region
      %26 = vsyncadd [#allocation5], 0
      %s27 = sshll.u32 %s1, 4
      %s28 = int_to_ptr.hbm [resolvable:$true] %s27
      %s29 = sshll.u32 [#allocation4], 4
      %s30 = int_to_ptr.vmem [resolvable:$true] %s29
      %35 = dma.hbm_to_vmem [thread:$0]  %s28, 512, %s30, [#allocation5], 128, 128, 8
    $region9: #{ar_attention_pallas.7} parent=1 // pred_fallthru
      _
    // Predicated region
    $region10: #{ar_attention_pallas.7} parent=1 // pred_check
      _
    $region11: #{ar_attention_pallas.7} parent=1 // pred_check_branch
      %37 = sbr.rel (0) target = $region13
    $region12: #{ar_attention_pallas.7} parent=1 // pred_region
      _
    $region13: #{ar_attention_pallas.7} parent=1 // pred_fallthru
      _
    // Predicated region
    $region14: #{ar_attention_pallas.7} parent=1 // pred_check
      _
    $region15: #{ar_attention_pallas.7} parent=1 // pred_check_branch
      %39 = sbr.rel (0) target = $region17
    $region16: #{ar_attention_pallas.7} parent=1 // pred_region
      %41 = dma.done [#allocation3], 2048
    $region17: #{ar_attention_pallas.7} parent=1 // pred_fallthru
      _
    // Predicated region
    $region18: #{ar_attention_pallas.7} parent=1 // pred_check
      _
    $region19: #{ar_attention_pallas.7} parent=1 // pred_check_branch
      %43 = sbr.rel (0) target = $region21
    $region20: #{ar_attention_pallas.7} parent=1 // pred_region
      %45 = dma.done [#allocation5], 512
    $region21: #{ar_attention_pallas.7} parent=1 // pred_fallthru
      _
    %v46 = vld [vmem:[#allocation2] sm:$0xff]
    %v47 = vld [vmem:[#allocation2 + $0x8] sm:$0xff]
    %v48 = vld [vmem:[#allocation2 + $0x10] sm:$0xff]
    %v49 = vld [vmem:[#allocation2 + $0x18] sm:$0xff]
    %v50 = vld [vmem:[#allocation2 + $0x20] sm:$0xff]
    %v51 = vld [vmem:[#allocation2 + $0x28] sm:$0xff]
    %v52 = vld [vmem:[#allocation2 + $0x30] sm:$0xff]
    %v53 = vld [vmem:[#allocation2 + $0x38] sm:$0xff]
    %v54 = vld [vmem:[#allocation2 + $0x40] sm:$0xff]
    %v55 = vld [vmem:[#allocation2 + $0x48] sm:$0xff]
    %v56 = vld [vmem:[#allocation2 + $0x50] sm:$0xff]
    %v57 = vld [vmem:[#allocation2 + $0x58] sm:$0xff]
    %v58 = vld [vmem:[#allocation2 + $0x60] sm:$0xff]
    %v59 = vld [vmem:[#allocation2 + $0x68] sm:$0xff]
    %v60 = vld [vmem:[#allocation2 + $0x70] sm:$0xff]
    %v61 = vld [vmem:[#allocation2 + $0x78] sm:$0xff]
    %v62 = vld [vmem:[#allocation4] sm:$0xff]
    %v63 = vld [vmem:[#allocation4 + $0x8] sm:$0xff]
    %v64 = vld [vmem:[#allocation4 + $0x10] sm:$0xff]
    %v65 = vld [vmem:[#allocation4 + $0x18] sm:$0xff]
    %v66 = vld [vmem:[%s2] sm:$0x1]
    %v68 = vperm.slane %v66, 0
    %vm70 = vcmask 261120
    %v72 = vsel %vm70, %v46, 0
    %v75 = vsel %vm70, %v47, 0
    %v78 = vsel %vm70, %v48, 0
    %v81 = vsel %vm70, %v49, 0
    %v84 = vsel %vm70, %v50, 0
    %v87 = vsel %vm70, %v51, 0
    %v90 = vsel %vm70, %v52, 0
    %v93 = vsel %vm70, %v53, 0
    %v96 = vsel %vm70, %v54, 0
    %v99 = vsel %vm70, %v55, 0
    %v102 = vsel %vm70, %v56, 0
    %v105 = vsel %vm70, %v57, 0
    %v108 = vsel %vm70, %v58, 0
    %v111 = vsel %vm70, %v59, 0
    %v114 = vsel %vm70, %v60, 0
    %v117 = vsel %vm70, %v61, 0
    %119 = vmatpush.msra.mxu0 0.0
    %120 = vmatpush.msra.mxu0 0.0
    %121 = vmatpush.msra.mxu0 0.0
    %122 = vmatpush.msra.mxu0 0.0
    %123 = vmatpush.msra.mxu0 0.0
    %124 = vmatpush.msra.mxu0 0.0
    %125 = vmatpush.msra.mxu0 0.0
    %126 = vmatpush.msra.mxu0 0.0
    %127 = vmatpush.msra.mxu0 0.0
    %128 = vmatpush.msra.mxu0 0.0
    %129 = vmatpush.msra.mxu0 0.0
    %130 = vmatpush.msra.mxu0 0.0
    %131 = vmatpush.msra.mxu0 %v65
    %132 = vmatpush.msra.mxu0 %v64
    %133 = vmatpush.msra.mxu0 %v63
    %134 = vmatpush.msra.mxu0 %v62
    %135 = vmatmul.f32.gmra.mxu0 %v72
    %v136 = vpop.f32.mrf.mxu0
    %v137 = vadd.f32 %v68, %v136
    %138 = vmatmul.f32.gmra.mxu0 %v75
    %v139 = vpop.f32.mrf.mxu0
    %v140 = vadd.f32 %v68, %v139
    %141 = vmatmul.f32.gmra.mxu0 %v78
    %v142 = vpop.f32.mrf.mxu0
    %v143 = vadd.f32 %v68, %v142
    %144 = vmatmul.f32.gmra.mxu0 %v81
    %v145 = vpop.f32.mrf.mxu0
    %v146 = vadd.f32 %v68, %v145
    %147 = vmatmul.f32.gmra.mxu0 %v84
    %v148 = vpop.f32.mrf.mxu0
    %v149 = vadd.f32 %v68, %v148
    %150 = vmatmul.f32.gmra.mxu0 %v87
    %v151 = vpop.f32.mrf.mxu0
    %v152 = vadd.f32 %v68, %v151
    %153 = vmatmul.f32.gmra.mxu0 %v90
    %v154 = vpop.f32.mrf.mxu0
    %v155 = vadd.f32 %v68, %v154
    %156 = vmatmul.f32.gmra.mxu0 %v93
    %v157 = vpop.f32.mrf.mxu0
    %v158 = vadd.f32 %v68, %v157
    %159 = vmatmul.f32.gmra.mxu0 %v96
    %v160 = vpop.f32.mrf.mxu0
    %v161 = vadd.f32 %v68, %v160
    %162 = vmatmul.f32.gmra.mxu0 %v99
    %v163 = vpop.f32.mrf.mxu0
    %v164 = vadd.f32 %v68, %v163
    %165 = vmatmul.f32.gmra.mxu0 %v102
    %v166 = vpop.f32.mrf.mxu0
    %v167 = vadd.f32 %v68, %v166
    %168 = vmatmul.f32.gmra.mxu0 %v105
    %v169 = vpop.f32.mrf.mxu0
    %v170 = vadd.f32 %v68, %v169
    %171 = vmatmul.f32.gmra.mxu0 %v108
    %v172 = vpop.f32.mrf.mxu0
    %v173 = vadd.f32 %v68, %v172
    %174 = vmatmul.f32.gmra.mxu0 %v111
    %v175 = vpop.f32.mrf.mxu0
    %v176 = vadd.f32 %v68, %v175
    %177 = vmatmul.f32.gmra.mxu0 %v114
    %v178 = vpop.f32.mrf.mxu0
    %v179 = vadd.f32 %v68, %v178
    %180 = vmatmul.f32.gmra.mxu0 %v117
    %v181 = vpop.f32.mrf.mxu0
    %v182 = vadd.f32 %v68, %v181
    %183 = vdwg.mxu0
    %vm184 = vcmask 785408
    %185 = vst.msk [vmem:[%s3] sm:$0xff] %vm184, %v137
    %186 = vst.msk [vmem:[%s3 + $0x8] sm:$0xff] %vm184, %v140
    %187 = vst.msk [vmem:[%s3 + $0x10] sm:$0xff] %vm184, %v143
    %188 = vst.msk [vmem:[%s3 + $0x18] sm:$0xff] %vm184, %v146
    %189 = vst.msk [vmem:[%s3 + $0x20] sm:$0xff] %vm184, %v149
    %190 = vst.msk [vmem:[%s3 + $0x28] sm:$0xff] %vm184, %v152
    %191 = vst.msk [vmem:[%s3 + $0x30] sm:$0xff] %vm184, %v155
    %192 = vst.msk [vmem:[%s3 + $0x38] sm:$0xff] %vm184, %v158
    %193 = vst.msk [vmem:[%s3 + $0x40] sm:$0xff] %vm184, %v161
    %194 = vst.msk [vmem:[%s3 + $0x48] sm:$0xff] %vm184, %v164
    %195 = vst.msk [vmem:[%s3 + $0x50] sm:$0xff] %vm184, %v167
    %196 = vst.msk [vmem:[%s3 + $0x58] sm:$0xff] %vm184, %v170
    %197 = vst.msk [vmem:[%s3 + $0x60] sm:$0xff] %vm184, %v173
    %198 = vst.msk [vmem:[%s3 + $0x68] sm:$0xff] %vm184, %v176
    %199 = vst.msk [vmem:[%s3 + $0x70] sm:$0xff] %vm184, %v179
    %200 = vst.msk [vmem:[%s3 + $0x78] sm:$0xff] %vm184, %v182
    // Predicated region
    $region22: #{ar_attention_pallas.7} parent=1 // pred_check
      _
    $region23: #{ar_attention_pallas.7} parent=1 // pred_check_branch
      %202 = sbr.rel (0) target = $region25
    $region24: #{ar_attention_pallas.7} parent=1 // pred_region
      _
    $region25: #{ar_attention_pallas.7} parent=1 // pred_fallthru
      _
    // Predicated region
    $region26: #{ar_attention_pallas.7} parent=1 // pred_check
      _
    $region27: #{ar_attention_pallas.7} parent=1 // pred_check_branch
      %204 = sbr.rel (0) target = $region29
    $region28: #{ar_attention_pallas.7} parent=1 // pred_region
      _
    $region29: #{ar_attention_pallas.7} parent=1 // pred_fallthru
      _
    %205 = vsyncpa [#allocation3], 1
    %206 = vsyncpa [#allocation5], 1

// kernel: ar_attention_pallas.13
$region0: #{ar_attention_pallas.13}
  #allocation0 [shape = 'u32[]', space=smem, size = 0x4, offset = 0x4, fixed_abs, tag = 'smem constant byte address 0x4 - core index']
  #allocation1 [shape = 'u32[72,128]{1,0:T(1,128)}', space=vmem, size = 0x9000, scoped, tag = 'internal scratch']
  %s0 = inlined_call_operand.vmem [shape: f32[128,32], index: 0, kind: input, shape index: {}]
  %s1 = inlined_call_operand.vmem [shape: f32[128,32], index: 1, kind: input, shape index: {}]
  %s2 = inlined_call_operand.vmem [shape: f32[128,32], index: 2, kind: input, shape index: {}]
  %s3 = inlined_call_operand.vmem [shape: f32[32,32], index: 3, kind: input, shape index: {}]
  %s4 = inlined_call_operand.vmem [shape: f32[1,32], index: 4, kind: input, shape index: {}]
  %s5 = inlined_call_operand.hbm [shape: f32[128,32], index: 5, kind: output, shape index: {}]
  %s6 = sld [smem:[#allocation0]]
  $region30: #{ar_attention_pallas.13} parent=0
    _
  %s8 = ssub.s32 1, %s6
  %s9 = scalar_select 0, %s8, %s6
  $region1: #{ar_attention_pallas.13} parent=0
    #allocation2 [shape = 'u8[65536]{0}', space=vmem, size = 0x10000, scoped, tag = 'output window, operand 0, single buffered']
    #allocation3 [shape = 's32[1]{0}', space=sflag, size = 0x4, scoped, tag = 'scoped memory for ar_attention_pallas.13']
    %10 = vsyncpa [#allocation3], 0
    // Predicated region
    $region2: #{ar_attention_pallas.13} parent=1 // pred_check
      _
    $region3: #{ar_attention_pallas.13} parent=1 // pred_check_branch
      %12 = sbr.rel (0) target = $region5
    $region4: #{ar_attention_pallas.13} parent=1 // pred_region
      _
    $region5: #{ar_attention_pallas.13} parent=1 // pred_fallthru
      _
    // Predicated region
    $region6: #{ar_attention_pallas.13} parent=1 // pred_check
      _
    $region7: #{ar_attention_pallas.13} parent=1 // pred_check_branch
      %14 = sbr.rel (0) target = $region9
    $region8: #{ar_attention_pallas.13} parent=1 // pred_region
      _
    $region9: #{ar_attention_pallas.13} parent=1 // pred_fallthru
      _
    // Predicated region
    $region10: #{ar_attention_pallas.13} parent=1 // pred_check
      _
    $region11: #{ar_attention_pallas.13} parent=1 // pred_check_branch
      %16 = sbr.rel (0) target = $region13
    $region12: #{ar_attention_pallas.13} parent=1 // pred_region
      _
    $region13: #{ar_attention_pallas.13} parent=1 // pred_fallthru
      _
    // Predicated region
    $region14: #{ar_attention_pallas.13} parent=1 // pred_check
      _
    $region15: #{ar_attention_pallas.13} parent=1 // pred_check_branch
      %18 = sbr.rel (0) target = $region17
    $region16: #{ar_attention_pallas.13} parent=1 // pred_region
      _
    $region17: #{ar_attention_pallas.13} parent=1 // pred_fallthru
      _
    // Predicated region
    $region18: #{ar_attention_pallas.13} parent=1 // pred_check
      _
    $region19: #{ar_attention_pallas.13} parent=1 // pred_check_branch
      %20 = sbr.rel (0) target = $region21
    $region20: #{ar_attention_pallas.13} parent=1 // pred_region
      _
    $region21: #{ar_attention_pallas.13} parent=1 // pred_fallthru
      _
    %v21 = vld [vmem:[%s0] sm:$0xff]
    %v22 = vld [vmem:[%s0 + $0x8] sm:$0xff]
    %v23 = vld [vmem:[%s0 + $0x10] sm:$0xff]
    %v24 = vld [vmem:[%s0 + $0x18] sm:$0xff]
    %v25 = vld [vmem:[%s0 + $0x20] sm:$0xff]
    %v26 = vld [vmem:[%s0 + $0x28] sm:$0xff]
    %v27 = vld [vmem:[%s0 + $0x30] sm:$0xff]
    %v28 = vld [vmem:[%s0 + $0x38] sm:$0xff]
    %v29 = vld [vmem:[%s0 + $0x40] sm:$0xff]
    %v30 = vld [vmem:[%s0 + $0x48] sm:$0xff]
    %v31 = vld [vmem:[%s0 + $0x50] sm:$0xff]
    %v32 = vld [vmem:[%s0 + $0x58] sm:$0xff]
    %v33 = vld [vmem:[%s0 + $0x60] sm:$0xff]
    %v34 = vld [vmem:[%s0 + $0x68] sm:$0xff]
    %v35 = vld [vmem:[%s0 + $0x70] sm:$0xff]
    %v36 = vld [vmem:[%s0 + $0x78] sm:$0xff]
    %v37 = vld [vmem:[%s1] sm:$0xff]
    %v38 = vld [vmem:[%s1 + $0x8] sm:$0xff]
    %v39 = vld [vmem:[%s1 + $0x10] sm:$0xff]
    %v40 = vld [vmem:[%s1 + $0x18] sm:$0xff]
    %v41 = vld [vmem:[%s1 + $0x20] sm:$0xff]
    %v42 = vld [vmem:[%s1 + $0x28] sm:$0xff]
    %v43 = vld [vmem:[%s1 + $0x30] sm:$0xff]
    %v44 = vld [vmem:[%s1 + $0x38] sm:$0xff]
    %v45 = vld [vmem:[%s1 + $0x40] sm:$0xff]
    %v46 = vld [vmem:[%s1 + $0x48] sm:$0xff]
    %v47 = vld [vmem:[%s1 + $0x50] sm:$0xff]
    %v48 = vld [vmem:[%s1 + $0x58] sm:$0xff]
    %v49 = vld [vmem:[%s1 + $0x60] sm:$0xff]
    %v50 = vld [vmem:[%s1 + $0x68] sm:$0xff]
    %v51 = vld [vmem:[%s1 + $0x70] sm:$0xff]
    %v52 = vld [vmem:[%s1 + $0x78] sm:$0xff]
    %v53 = vadd.f32 %v21, %v37
    %v54 = vadd.f32 %v22, %v38
    %v55 = vadd.f32 %v23, %v39
    %v56 = vadd.f32 %v24, %v40
    %v57 = vadd.f32 %v25, %v41
    %v58 = vadd.f32 %v26, %v42
    %v59 = vadd.f32 %v27, %v43
    %v60 = vadd.f32 %v28, %v44
    %v61 = vadd.f32 %v29, %v45
    %v62 = vadd.f32 %v30, %v46
    %v63 = vadd.f32 %v31, %v47
    %v64 = vadd.f32 %v32, %v48
    %v65 = vadd.f32 %v33, %v49
    %v66 = vadd.f32 %v34, %v50
    %v67 = vadd.f32 %v35, %v51
    %v68 = vadd.f32 %v36, %v52
    %v69 = vld [vmem:[%s2] sm:$0xff]
    %v70 = vld [vmem:[%s2 + $0x8] sm:$0xff]
    %v71 = vld [vmem:[%s2 + $0x10] sm:$0xff]
    %v72 = vld [vmem:[%s2 + $0x18] sm:$0xff]
    %v73 = vld [vmem:[%s2 + $0x20] sm:$0xff]
    %v74 = vld [vmem:[%s2 + $0x28] sm:$0xff]
    %v75 = vld [vmem:[%s2 + $0x30] sm:$0xff]
    %v76 = vld [vmem:[%s2 + $0x38] sm:$0xff]
    %v77 = vld [vmem:[%s2 + $0x40] sm:$0xff]
    %v78 = vld [vmem:[%s2 + $0x48] sm:$0xff]
    %v79 = vld [vmem:[%s2 + $0x50] sm:$0xff]
    %v80 = vld [vmem:[%s2 + $0x58] sm:$0xff]
    %v81 = vld [vmem:[%s2 + $0x60] sm:$0xff]
    %v82 = vld [vmem:[%s2 + $0x68] sm:$0xff]
    %v83 = vld [vmem:[%s2 + $0x70] sm:$0xff]
    %v84 = vld [vmem:[%s2 + $0x78] sm:$0xff]
    %v85 = vmul.f32 %v69, 2.0
    %v86 = vmul.f32 %v70, 2.0
    %v87 = vmul.f32 %v71, 2.0
    %v88 = vmul.f32 %v72, 2.0
    %v89 = vmul.f32 %v73, 2.0
    %v90 = vmul.f32 %v74, 2.0
    %v91 = vmul.f32 %v75, 2.0
    %v92 = vmul.f32 %v76, 2.0
    %v93 = vmul.f32 %v77, 2.0
    %v94 = vmul.f32 %v78, 2.0
    %v95 = vmul.f32 %v79, 2.0
    %v96 = vmul.f32 %v80, 2.0
    %v97 = vmul.f32 %v81, 2.0
    %v98 = vmul.f32 %v82, 2.0
    %v99 = vmul.f32 %v83, 2.0
    %v100 = vmul.f32 %v84, 2.0
    %v101 = vadd.f32 %v53, %v85
    %v102 = vadd.f32 %v54, %v86
    %v103 = vadd.f32 %v55, %v87
    %v104 = vadd.f32 %v56, %v88
    %v105 = vadd.f32 %v57, %v89
    %v106 = vadd.f32 %v58, %v90
    %v107 = vadd.f32 %v59, %v91
    %v108 = vadd.f32 %v60, %v92
    %v109 = vadd.f32 %v61, %v93
    %v110 = vadd.f32 %v62, %v94
    %v111 = vadd.f32 %v63, %v95
    %v112 = vadd.f32 %v64, %v96
    %v113 = vadd.f32 %v65, %v97
    %v114 = vadd.f32 %v66, %v98
    %v115 = vadd.f32 %v67, %v99
    %v116 = vadd.f32 %v68, %v100
    %v117 = vld [vmem:[%s3] sm:$0xff]
    %v118 = vld [vmem:[%s3 + $0x8] sm:$0xff]
    %v119 = vld [vmem:[%s3 + $0x10] sm:$0xff]
    %v120 = vld [vmem:[%s3 + $0x18] sm:$0xff]
    %v121 = vld [vmem:[%s4] sm:$0x1]
    %v122 = vmul.f32 %v121, 2.0
    %v124 = vperm.slane %v122, 0
    %vm126 = vcmask 261120
    %v128 = vsel %vm126, %v101, 0
    %v131 = vsel %vm126, %v102, 0
    %v134 = vsel %vm126, %v103, 0
    %v137 = vsel %vm126, %v104, 0
    %v140 = vsel %vm126, %v105, 0
    %v143 = vsel %vm126, %v106, 0
    %v146 = vsel %vm126, %v107, 0
    %v149 = vsel %vm126, %v108, 0
    %v152 = vsel %vm126, %v109, 0
    %v155 = vsel %vm126, %v110, 0
    %v158 = vsel %vm126, %v111, 0
    %v161 = vsel %vm126, %v112, 0
    %v164 = vsel %vm126, %v113, 0
    %v167 = vsel %vm126, %v114, 0
    %v170 = vsel %vm126, %v115, 0
    %v173 = vsel %vm126, %v116, 0
    %175 = vmatpush.msra.mxu0 0.0
    %176 = vmatpush.msra.mxu0 0.0
    %177 = vmatpush.msra.mxu0 0.0
    %178 = vmatpush.msra.mxu0 0.0
    %179 = vmatpush.msra.mxu0 0.0
    %180 = vmatpush.msra.mxu0 0.0
    %181 = vmatpush.msra.mxu0 0.0
    %182 = vmatpush.msra.mxu0 0.0
    %183 = vmatpush.msra.mxu0 0.0
    %184 = vmatpush.msra.mxu0 0.0
    %185 = vmatpush.msra.mxu0 0.0
    %186 = vmatpush.msra.mxu0 0.0
    %187 = vmatpush.msra.mxu0 %v120
    %188 = vmatpush.msra.mxu0 %v119
    %189 = vmatpush.msra.mxu0 %v118
    %190 = vmatpush.msra.mxu0 %v117
    %191 = vmatmul.f32.gmra.mxu0 %v128
    %v192 = vpop.f32.mrf.mxu0
    %v193 = vadd.f32 %v124, %v192
    %194 = vmatmul.f32.gmra.mxu0 %v131
    %v195 = vpop.f32.mrf.mxu0
    %v196 = vadd.f32 %v124, %v195
    %197 = vmatmul.f32.gmra.mxu0 %v134
    %v198 = vpop.f32.mrf.mxu0
    %v199 = vadd.f32 %v124, %v198
    %200 = vmatmul.f32.gmra.mxu0 %v137
    %v201 = vpop.f32.mrf.mxu0
    %v202 = vadd.f32 %v124, %v201
    %203 = vmatmul.f32.gmra.mxu0 %v140
    %v204 = vpop.f32.mrf.mxu0
    %v205 = vadd.f32 %v124, %v204
    %206 = vmatmul.f32.gmra.mxu0 %v143
    %v207 = vpop.f32.mrf.mxu0
    %v208 = vadd.f32 %v124, %v207
    %209 = vmatmul.f32.gmra.mxu0 %v146
    %v210 = vpop.f32.mrf.mxu0
    %v211 = vadd.f32 %v124, %v210
    %212 = vmatmul.f32.gmra.mxu0 %v149
    %v213 = vpop.f32.mrf.mxu0
    %v214 = vadd.f32 %v124, %v213
    %215 = vmatmul.f32.gmra.mxu0 %v152
    %v216 = vpop.f32.mrf.mxu0
    %v217 = vadd.f32 %v124, %v216
    %218 = vmatmul.f32.gmra.mxu0 %v155
    %v219 = vpop.f32.mrf.mxu0
    %v220 = vadd.f32 %v124, %v219
    %221 = vmatmul.f32.gmra.mxu0 %v158
    %v222 = vpop.f32.mrf.mxu0
    %v223 = vadd.f32 %v124, %v222
    %224 = vmatmul.f32.gmra.mxu0 %v161
    %v225 = vpop.f32.mrf.mxu0
    %v226 = vadd.f32 %v124, %v225
    %227 = vmatmul.f32.gmra.mxu0 %v164
    %v228 = vpop.f32.mrf.mxu0
    %v229 = vadd.f32 %v124, %v228
    %230 = vmatmul.f32.gmra.mxu0 %v167
    %v231 = vpop.f32.mrf.mxu0
    %v232 = vadd.f32 %v124, %v231
    %233 = vmatmul.f32.gmra.mxu0 %v170
    %v234 = vpop.f32.mrf.mxu0
    %v235 = vadd.f32 %v124, %v234
    %236 = vmatmul.f32.gmra.mxu0 %v173
    %v237 = vpop.f32.mrf.mxu0
    %v238 = vadd.f32 %v124, %v237
    %239 = vdwg.mxu0
    %240 = vst.msk [vmem:[#allocation2] sm:$0xff] %vm126, %v193
    %241 = vst.msk [vmem:[#allocation2 + $0x8] sm:$0xff] %vm126, %v196
    %242 = vst.msk [vmem:[#allocation2 + $0x10] sm:$0xff] %vm126, %v199
    %243 = vst.msk [vmem:[#allocation2 + $0x18] sm:$0xff] %vm126, %v202
    %244 = vst.msk [vmem:[#allocation2 + $0x20] sm:$0xff] %vm126, %v205
    %245 = vst.msk [vmem:[#allocation2 + $0x28] sm:$0xff] %vm126, %v208
    %246 = vst.msk [vmem:[#allocation2 + $0x30] sm:$0xff] %vm126, %v211
    %247 = vst.msk [vmem:[#allocation2 + $0x38] sm:$0xff] %vm126, %v214
    %248 = vst.msk [vmem:[#allocation2 + $0x40] sm:$0xff] %vm126, %v217
    %249 = vst.msk [vmem:[#allocation2 + $0x48] sm:$0xff] %vm126, %v220
    %250 = vst.msk [vmem:[#allocation2 + $0x50] sm:$0xff] %vm126, %v223
    %251 = vst.msk [vmem:[#allocation2 + $0x58] sm:$0xff] %vm126, %v226
    %252 = vst.msk [vmem:[#allocation2 + $0x60] sm:$0xff] %vm126, %v229
    %253 = vst.msk [vmem:[#allocation2 + $0x68] sm:$0xff] %vm126, %v232
    %254 = vst.msk [vmem:[#allocation2 + $0x70] sm:$0xff] %vm126, %v235
    %255 = vst.msk [vmem:[#allocation2 + $0x78] sm:$0xff] %vm126, %v238
    // Predicated region
    $region22: #{ar_attention_pallas.13} parent=1 // pred_check
      _
    $region23: #{ar_attention_pallas.13} parent=1 // pred_check_branch
      %257 = sbr.rel (0) target = $region25
    $region24: #{ar_attention_pallas.13} parent=1 // pred_region
      %259 = vsyncadd [#allocation3], 0
      %s260 = sshll.u32 [#allocation2], 4
      %s261 = int_to_ptr.vmem [resolvable:$true] %s260
      %s262 = sshll.u32 %s5, 4
      %s263 = int_to_ptr.hbm [resolvable:$true] %s262
      %268 = dma.vmem_to_hbm [thread:$0]  %s261, 2048, %s263, [#allocation3], 128, 128, 8
    $region25: #{ar_attention_pallas.13} parent=1 // pred_fallthru
      _
    // Predicated region
    $region26: #{ar_attention_pallas.13} parent=1 // pred_check
      _
    $region27: #{ar_attention_pallas.13} parent=1 // pred_check_branch
      %270 = sbr.rel (0) target = $region29
    $region28: #{ar_attention_pallas.13} parent=1 // pred_region
      %272 = dma.done [#allocation3], 2048
    $region29: #{ar_attention_pallas.13} parent=1 // pred_fallthru
      _
    %273 = vsyncpa [#allocation3], 1

// kernel: ar_attention_pallas.10
$region0: #{ar_attention_pallas.10}
  #allocation0 [shape = 'u32[]', space=smem, size = 0x4, offset = 0x4, fixed_abs, tag = 'smem constant byte address 0x4 - core index']
  #allocation1 [shape = 'u32[72,128]{1,0:T(1,128)}', space=vmem, size = 0x9000, scoped, tag = 'internal scratch']
  #allocation2 [shape = 'f32[16,4]{1,0:T(8,128)}', space=vmem, size = 0x2000, scoped, tag = 'scratch operand']
  #allocation3 [shape = 'f32[16,4]{1,0:T(8,128)}', space=vmem, size = 0x2000, scoped, tag = 'scratch operand']
  #allocation4 [shape = 'f32[16,32]{1,0:T(8,128)}', space=vmem, size = 0x2000, scoped, tag = 'scratch operand']
  #allocation5 [shape = 's32[1]{0}', space=sflag, size = 0x4, scoped, tag = 'scoped memory for ar_attention_pallas.10']
  #allocation6 [shape = 'u8[512]{0}', space=smem, size = 0x200, scoped, tag = 'prefetched SMEM operand 0']
  %s0 = inlined_call_operand.vmem [shape: s32[16], index: 0, kind: input, shape index: {}]
  %s1 = inlined_call_operand.vmem [shape: f32[2,4,16,96], index: 1, kind: input, shape index: {}, may-alias: {1,2}]
  %s2 = inlined_call_operand.vmem [shape: f32[2,4,16,96], index: 2, kind: input, shape index: {}, may-alias: {1,2}]
  %s3 = inlined_call_operand.vmem [shape: f32[2,4,16,32], index: 3, kind: output, shape index: {}]
  %s4 = sld [smem:[#allocation0]]
  $region49: #{ar_attention_pallas.10} parent=0
    _
  %s6 = ssub.s32 1, %s4
  %s7 = scalar_select 0, %s6, %s4
  %s9 = sshll.u32 %s0, 4
  %s10 = int_to_ptr.vmem [resolvable:$true] %s9
  %12 = dma.vmem_to_smem %s10, 16, [#allocation6], [#allocation5]
  %14 = dma.done [#allocation5], 16
  %15 = sfence
  loop: start=0, step=1, limit=18
  $region2: #{ar_attention_pallas.10} parent=0 // loop_pre_header
    _
  $region3: #{ar_attention_pallas.10} parent=0 // loop_header
    %s17 = sphi 0, %s21
    %p18 = scmp.ge.s32.totalorder %s17, 18
    %s24 = sphi 0, %s43
    %s25 = sphi 0, %s39
    %s26 = sphi 0, %s35
    %s27 = sphi 0, %s24
    %s28 = sphi 0, %s25
    %s29 = sphi 0, %s26
    %s30 = sphi 0, %s27
    %s31 = sphi 0, %s28
    %s32 = sphi 0, %s29
    %s48 = sphi 0, %s50
    %s51 = sphi 0, %s48
    %s52 = sphi 0, %s51
    %s68 = sphi 0, %s52
    %s86 = sphi 0, %s88
    %s89 = sphi 0, %s86
    %s90 = sphi 0, %s89
    %s106 = sphi 0, %s90
    %s114 = sphi 0, %s116
    %s117 = sphi 0, %s114
    %s118 = sphi 0, %s117
    %s134 = sphi 0, %s118
  $region4: #{ar_attention_pallas.10} parent=0 // loop_header_branch
    %20 = sbr.rel (%p18) target = $region8
  $region5: #{ar_attention_pallas.10} parent=0 // loop_body
    %s22 = ssub.s32 %s17, 1
    %s23 = ssub.s32 %s17, 2
    %s33 = sadd.s32 1, %s26
    %p34 = scmp.ge.s32.totalorder %s33, 2
    %s35 = scalar_select %p34, 0, %s33
    %s36 = sadd.s32 1, %s25
    %s37 = scalar_select %p34, %s36, %s25
    %p38 = scmp.ge.s32.totalorder %s37, 4
    %s39 = scalar_select %p38, 0, %s37
    %s40 = sadd.s32 1, %s24
    %s41 = scalar_select %p38, %s40, %s24
    %p42 = scmp.ge.s32.totalorder %s41, 2
    %s43 = scalar_select %p42, 0, %s41
    %s44 = ssub.s32 %s24, %s43
    %s45 = ssub.s32 %s25, %s39
    %s46 = sor.u32 %s44, %s45
    %p47 = scmp.eq.s32.totalorder %s46, 0
    %s49 = sadd.s32 %s48, 1
    %s50 = scalar_select %p47, %s48, %s49
    %p53 = pneg %p47
    %p54 = scmp.eq.s32.totalorder %s17, 15
    %p55 = por %p53, %p54
    %p56 = scmp.ne.s32.totalorder %s48, %s51
    %p57 = scmp.eq.s32.totalorder %s17, 0
    %p58 = por %p56, %p57
    %p59 = scmp.ne.s32.totalorder %s48, %s51
    %p60 = scmp.eq.s32.totalorder %s22, 15
    %p61 = por %p59, %p60
    %p62 = scmp.ne.s32.totalorder %s51, %s52
    %p63 = scmp.eq.s32.totalorder %s22, 0
    %p64 = por %p62, %p63
    %p65 = scmp.ne.s32.totalorder %s51, %s52
    %p66 = scmp.eq.s32.totalorder %s23, 15
    %p67 = por %p65, %p66
    %p69 = scmp.ne.s32.totalorder %s52, %s68
    %p70 = scmp.eq.s32.totalorder %s23, 0
    %p71 = por %p69, %p70
    %s72 = smul.u32 %s24, 4
    %s73 = sadd.s32 %s72, %s25
    %s74 = smul.u32 %s73, 2
    %s75 = sadd.s32 %s74, %s26
    %s76 = sld [smem:[#allocation6 + %s75]]
    %s77 = smul.u32 %s43, 4
    %s78 = sadd.s32 %s77, %s39
    %s79 = smul.u32 %s78, 2
    %s80 = sadd.s32 %s79, %s35
    %s81 = sld [smem:[#allocation6 + %s80]]
    %s82 = ssub.s32 %s24, %s43
    %s83 = ssub.s32 %s76, %s81
    %s84 = sor.u32 %s82, %s83
    %p85 = scmp.eq.s32.totalorder %s84, 0
    %s87 = sadd.s32 %s86, 1
    %s88 = scalar_select %p85, %s86, %s87
    %p91 = pneg %p85
    %p92 = scmp.eq.s32.totalorder %s17, 15
    %p93 = por %p91, %p92
    %p94 = scmp.ne.s32.totalorder %s86, %s89
    %p95 = scmp.eq.s32.totalorder %s17, 0
    %p96 = por %p94, %p95
    %p97 = scmp.ne.s32.totalorder %s86, %s89
    %p98 = scmp.eq.s32.totalorder %s22, 15
    %p99 = por %p97, %p98
    %p100 = scmp.ne.s32.totalorder %s89, %s90
    %p101 = scmp.eq.s32.totalorder %s22, 0
    %p102 = por %p100, %p101
    %p103 = scmp.ne.s32.totalorder %s89, %s90
    %p104 = scmp.eq.s32.totalorder %s23, 15
    %p105 = por %p103, %p104
    %p107 = scmp.ne.s32.totalorder %s90, %s106
    %p108 = scmp.eq.s32.totalorder %s23, 0
    %p109 = por %p107, %p108
    %s110 = ssub.s32 %s24, %s43
    %s111 = ssub.s32 %s25, %s39
    %s112 = sor.u32 %s110, %s111
    %p113 = scmp.eq.s32.totalorder %s112, 0
    %s115 = sadd.s32 %s114, 1
    %s116 = scalar_select %p113, %s114, %s115
    %p119 = pneg %p113
    %p120 = scmp.eq.s32.totalorder %s17, 15
    %p121 = por %p119, %p120
    %p122 = scmp.ne.s32.totalorder %s114, %s117
    %p123 = scmp.eq.s32.totalorder %s17, 0
    %p124 = por %p122, %p123
    %p125 = scmp.ne.s32.totalorder %s114, %s117
    %p126 = scmp.eq.s32.totalorder %s22, 15
    %p127 = por %p125, %p126
    %p128 = scmp.ne.s32.totalorder %s117, %s118
    %p129 = scmp.eq.s32.totalorder %s22, 0
    %p130 = por %p128, %p129
    %p131 = scmp.ne.s32.totalorder %s117, %s118
    %p132 = scmp.eq.s32.totalorder %s23, 15
    %p133 = por %p131, %p132
    %p135 = scmp.ne.s32.totalorder %s118, %s134
    %p136 = scmp.eq.s32.totalorder %s23, 0
    %p137 = por %p135, %p136
    %p138 = scmp.le.s32.totalorder 1, %s17
    %p139 = scmp.lt.s32.totalorder %s17, 17
    %p140 = pnand %p138, %p139
    %p141 = pneg %p140
    // Predicated region
    $region9: #{ar_attention_pallas.10} parent=5 // pred_check
      _
    $region10: #{ar_attention_pallas.10} parent=5 // pred_check_branch
      %143 = sbr.rel (%p140) target = $region12
    $region11: #{ar_attention_pallas.10} parent=5 // pred_region
      %s144 = ssub.s32 %s17, 1
    $region12: #{ar_attention_pallas.10} parent=5 // pred_fallthru
      _
    %p145 = scmp.lt.s32.totalorder %s17, 16
    // Predicated region
    $region13: #{ar_attention_pallas.10} parent=5 // pred_check
      %p146 = pneg %p145
    $region14: #{ar_attention_pallas.10} parent=5 // pred_check_branch
      %148 = sbr.rel (%p146) target = $region16
    $region15: #{ar_attention_pallas.10} parent=5 // pred_region
      // Predicated region
      $region17: #{ar_attention_pallas.10} parent=15 // pred_check
        %p149 = pneg %p58
      $region18: #{ar_attention_pallas.10} parent=15 // pred_check_branch
        %151 = sbr.rel (%p149) target = $region20
      $region19: #{ar_attention_pallas.10} parent=15 // pred_region
        %p152 = scmp.lt.s32.totalorder %s24, 1
        %s153 = scalar_select %p152, %s24, 1
        %p154 = scmp.lt.s32.totalorder %s25, 3
        %s155 = scalar_select %p154, %s25, 3
        %s156 = smul.addr %s155, 2
        %s157 = smul.addr %s153, 8
        %s158 = sadd.s32 %s156, %s157
        %s159 = smul.addr %s158, 8
        %s160 = scalar_lea.vmem %s1, %s159
      $region20: #{ar_attention_pallas.10} parent=15 // pred_fallthru
        _
      // Predicated region
      $region21: #{ar_attention_pallas.10} parent=15 // pred_check
        %p161 = pneg %p96
      $region22: #{ar_attention_pallas.10} parent=15 // pred_check_branch
        %163 = sbr.rel (%p161) target = $region24
      $region23: #{ar_attention_pallas.10} parent=15 // pred_region
        %s164 = smul.u32 %s24, 4
        %s165 = sadd.s32 %s164, %s25
        %s166 = smul.u32 %s165, 2
        %s167 = sadd.s32 %s166, %s26
        %s168 = sld [smem:[#allocation6 + %s167]]
        %p169 = scmp.lt.s32.totalorder %s24, 1
        %s170 = scalar_select %p169, %s24, 1
        %p171 = scmp.lt.s32.totalorder %s168, 3
        %s172 = scalar_select %p171, %s168, 3
        %s173 = smul.addr %s172, 2
        %s174 = smul.addr %s170, 8
        %s175 = sadd.s32 %s173, %s174
        %s176 = smul.addr %s175, 8
        %s177 = scalar_lea.vmem %s2, %s176
        %s178 = smul.u32 %s24, 4
        %s179 = sadd.s32 %s178, %s25
        %s180 = smul.u32 %s179, 2
        %s181 = sadd.s32 %s180, %s26
        %s182 = sld [smem:[#allocation6 + %s181]]
      $region24: #{ar_attention_pallas.10} parent=15 // pred_fallthru
        _
    $region16: #{ar_attention_pallas.10} parent=5 // pred_fallthru
      _
    %p183 = scmp.le.s32.totalorder 1, %s17
    %p184 = scmp.lt.s32.totalorder %s17, 17
    %p185 = pnand %p183, %p184
    %p186 = pneg %p185
    // Predicated region
    $region25: #{ar_attention_pallas.10} parent=5 // pred_check
      _
    $region26: #{ar_attention_pallas.10} parent=5 // pred_check_branch
      %188 = sbr.rel (%p185) target = $region28
    $region27: #{ar_attention_pallas.10} parent=5 // pred_region
      %s189 = ssub.s32 %s17, 1
      %p190 = scmp.lt.s32.totalorder %s27, 1
      %s191 = scalar_select %p190, %s27, 1
      %p192 = scmp.lt.s32.totalorder %s28, 3
      %s193 = scalar_select %p192, %s28, 3
      %s194 = smul.addr %s193, 2
      %s195 = smul.addr %s191, 8
      %s196 = sadd.s32 %s194, %s195
      %s197 = smul.addr %s196, 8
      %s198 = scalar_lea.vmem %s1, %s197
      %p199 = pneg %p64
      %p200 = pneg %p61
      %s201 = smul.u32 %s27, 4
      %s202 = sadd.s32 %s201, %s28
      %s203 = smul.u32 %s202, 2
      %s204 = sadd.s32 %s203, %s29
      %s205 = sld [smem:[#allocation6 + %s204]]
      %p206 = scmp.lt.s32.totalorder %s27, 1
      %s207 = scalar_select %p206, %s27, 1
      %p208 = scmp.lt.s32.totalorder %s205, 3
      %s209 = scalar_select %p208, %s205, 3
      %s210 = smul.addr %s209, 2
      %s211 = smul.addr %s207, 8
      %s212 = sadd.s32 %s210, %s211
      %s213 = smul.addr %s212, 8
      %s214 = scalar_lea.vmem %s2, %s213
      %p215 = pneg %p102
      %p216 = pneg %p99
      %p217 = pneg %p130
      %p218 = pneg %p127
      %p219 = scmp.lt.s32.totalorder %s27, 1
      %s220 = scalar_select %p219, %s27, 1
      %p221 = scmp.lt.s32.totalorder %s28, 3
      %s222 = scalar_select %p221, %s28, 3
      %s223 = smul.addr %s222, 2
      %s224 = smul.addr %s220, 8
      %s225 = sadd.s32 %s223, %s224
      %s226 = smul.addr %s225, 8
      %s227 = scalar_lea.vmem %s3, %s226
      %p228 = scmp.lt.s32.totalorder %s27, 1
      %s229 = scalar_select %p228, %s27, 1
      %p230 = scmp.lt.s32.totalorder %s28, 3
      %s231 = scalar_select %p230, %s28, 3
      %s232 = smul.addr %s231, 2
      %s233 = smul.addr %s229, 8
      %s234 = sadd.s32 %s232, %s233
      %s235 = smul.addr %s234, 8
      %s236 = scalar_lea.vmem %s1, %s235
      %s237 = smul.u32 %s27, 4
      %s238 = sadd.s32 %s237, %s28
      %s239 = smul.u32 %s238, 2
      %s240 = sadd.s32 %s239, %s29
      %s241 = sld [smem:[#allocation6 + %s240]]
      %p242 = scmp.lt.s32.totalorder %s27, 1
      %s243 = scalar_select %p242, %s27, 1
      %p244 = scmp.lt.s32.totalorder %s241, 3
      %s245 = scalar_select %p244, %s241, 3
      %s246 = smul.addr %s245, 2
      %s247 = smul.addr %s243, 8
      %s248 = sadd.s32 %s246, %s247
      %s249 = smul.addr %s248, 8
      %s250 = scalar_lea.vmem %s2, %s249
      %s251 = smul.u32 %s27, 4
      %s252 = sadd.s32 %s251, %s28
      %s253 = smul.u32 %s252, 2
      %s254 = sadd.s32 %s253, %s29
      %s255 = sld [smem:[#allocation6 + %s254]]
      %p256 = scmp.lt.s32.totalorder %s27, 1
      %s257 = scalar_select %p256, %s27, 1
      %p258 = scmp.lt.s32.totalorder %s28, 3
      %s259 = scalar_select %p258, %s28, 3
      %s260 = smul.addr %s259, 2
      %s261 = smul.addr %s257, 8
      %s262 = sadd.s32 %s260, %s261
      %s263 = smul.addr %s262, 8
      %s264 = scalar_lea.vmem %s3, %s263
      %p265 = scmp.eq.s32.totalorder %s29, 0
      // Predicated region
      $region29: #{ar_attention_pallas.10} parent=27 // pred_check
        %p266 = pneg %p265
      $region30: #{ar_attention_pallas.10} parent=27 // pred_check_branch
        %268 = sbr.rel (%p266) target = $region32
      $region31: #{ar_attention_pallas.10} parent=27 // pred_region
        %vm269 = vcmask 31744
        %270 = vst.msk [vmem:[#allocation2] sm:$0xff] %vm269, -inf
        %271 = vst.msk [vmem:[#allocation2 + $0x8] sm:$0xff] %vm269, -inf
        %272 = vst.msk [vmem:[#allocation3] sm:$0xff] %vm269, 0.0
        %273 = vst.msk [vmem:[#allocation3 + $0x8] sm:$0xff] %vm269, 0.0
        %vm274 = vcmask 261120
        %275 = vst.msk [vmem:[#allocation4] sm:$0xff] %vm274, 0.0
        %276 = vst.msk [vmem:[#allocation4 + $0x8] sm:$0xff] %vm274, 0.0
      $region32: #{ar_attention_pallas.10} parent=27 // pred_fallthru
        _
      %v277 = vld [vmem:[%s236] sm:$0xff]
      %v278 = vld [vmem:[%s236 + $0x8] sm:$0xff]
      %v279 = vld [vmem:[%s250] sm:$0xff]
      %v280 = vld [vmem:[%s250 + $0x8] sm:$0xff]
      %v281 = vld [vmem:[#allocation2] sm:$0xff]
      %v282 = vld [vmem:[#allocation2 + $0x8] sm:$0xff]
      %v283 = vld [vmem:[#allocation3] sm:$0xff]
      %v284 = vld [vmem:[#allocation3 + $0x8] sm:$0xff]
      %v285 = vld [vmem:[#allocation4] sm:$0xff]
      %v286 = vld [vmem:[#allocation4 + $0x8] sm:$0xff]
      %v287 = vmul.f32 %v277, 0.17677669
      %v288 = vmul.f32 %v278, 0.17677669
      %291 = vrot.lane.b32.xlu0 %v279, 96
      %v292 = vpop.permute.xlu0 %291
      %293 = vrot.lane.b32.xlu0 %v280, 96
      %v294 = vpop.permute.xlu0 %293
      %vm295 = vcmask 64512
      %v297 = vsel %vm295, %v287, 0
      %v300 = vsel %vm295, %v288, 0
      %v302 = vsel %vm295, %v292, 0
      %v304 = vsel %vm295, %v294, 0
      %306 = vmatpush.xpose.msra.mxu0 0.0
      %307 = vmatpush.xpose.msra.mxu0 0.0
      %308 = vmatpush.xpose.msra.mxu0 0.0
      %309 = vmatpush.xpose.msra.mxu0 0.0
      %310 = vmatpush.xpose.msra.mxu0 0.0
      %311 = vmatpush.xpose.msra.mxu0 0.0
      %312 = vmatpush.xpose.msra.mxu0 0.0
      %313 = vmatpush.xpose.msra.mxu0 0.0
      %314 = vmatpush.xpose.msra.mxu0 0.0
      %315 = vmatpush.xpose.msra.mxu0 0.0
      %316 = vmatpush.xpose.msra.mxu0 0.0
      %317 = vmatpush.xpose.msra.mxu0 0.0
      %318 = vmatpush.xpose.msra.mxu0 0.0
      %319 = vmatpush.xpose.msra.mxu0 0.0
      %320 = vmatpush.xpose.msra.mxu0 %v304
      %321 = vmatpush.xpose.msra.mxu0 %v302
      %322 = vmatmul.f32.gmra.mxu0 %v297
      %v323 = vpop.f32.mrf.mxu0
      %v324 = vadd.f32 0.0, %v323
      %325 = vmatmul.f32.gmra.mxu0 %v300
      %v326 = vpop.f32.mrf.mxu0
      %v327 = vadd.f32 0.0, %v326
      %328 = vdwg.mxu0
      %vm329 = vcmask 130048
      %v330 = vsel %vm329, %v324, -inf
      %331 = vmax.xlane.f32.xlu0 %v330
      %v332 = vpop.xlane.xlu0 %331
      %v333 = vsel %vm329, %v327, -inf
      %334 = vmax.xlane.f32.xlu0 %v333
      %v335 = vpop.xlane.xlu0 %334
      %v336 = vmax.f32 %v281, %v332
      %v337 = vmax.f32 %v282, %v335
      %v338 = vsub.f32 %v281, %v336
      %v339 = vsub.f32 %v282, %v337
      %v340 = vmul.f32 %v338, 1.442695
      %v341 = vpow.pop %v340
      %v342 = vmul.f32 %v339, 1.442695
      %v343 = vpow.pop %v342
      %345 = vset.pattern.permute.xlu0 0
      %346 = vperm.xlu0 %345, %v336
      %v347 = vpop.permute.xlu0 %346
      %350 = vset.pattern.permute.xlu0 0
      %351 = vperm.xlu0 %350, %v337
      %v352 = vpop.permute.xlu0 %351
      %v354 = vsub.f32 %v324, %v347
      %v355 = vsub.f32 %v327, %v352
      %v356 = vmul.f32 %v354, 1.442695
      %v357 = vpow.pop %v356
      %v358 = vmul.f32 %v355, 1.442695
      %v359 = vpow.pop %v358
      %v360 = vmul.f32 %v341, %v283
      %v361 = vmul.f32 %v343, %v284
      %v362 = vsel %vm329, %v357, 0.0
      %363 = vadd.xlane.f32.xlu0 %v362
      %v364 = vpop.xlane.xlu0 %363
      %v365 = vsel %vm329, %v359, 0.0
      %366 = vadd.xlane.f32.xlu0 %v365
      %v367 = vpop.xlane.xlu0 %366
      %v368 = vadd.f32 %v360, %v364
      %v369 = vadd.f32 %v361, %v367
      %371 = vset.pattern.permute.xlu0 0
      %372 = vperm.xlu0 %371, %v341
      %v373 = vpop.permute.xlu0 %372
      %376 = vset.pattern.permute.xlu0 0
      %377 = vperm.xlu0 %376, %v343
      %v378 = vpop.permute.xlu0 %377
      %v380 = vmul.f32 %v373, %v285
      %v381 = vmul.f32 %v378, %v286
      %382 = vrot.lane.b32.xlu0 %v279, 64
      %v383 = vpop.permute.xlu0 %382
      %384 = vrot.lane.b32.xlu0 %v280, 64
      %v385 = vpop.permute.xlu0 %384
      %v389 = vsel %vm329, %v357, 0
      %v392 = vsel %vm329, %v359, 0
      %394 = vmatpush.msra.mxu0 0.0
      %395 = vmatpush.msra.mxu0 0.0
      %396 = vmatpush.msra.mxu0 0.0
      %397 = vmatpush.msra.mxu0 0.0
      %398 = vmatpush.msra.mxu0 0.0
      %399 = vmatpush.msra.mxu0 0.0
      %400 = vmatpush.msra.mxu0 0.0
      %401 = vmatpush.msra.mxu0 0.0
      %402 = vmatpush.msra.mxu0 0.0
      %403 = vmatpush.msra.mxu0 0.0
      %404 = vmatpush.msra.mxu0 0.0
      %405 = vmatpush.msra.mxu0 0.0
      %406 = vmatpush.msra.mxu0 0.0
      %407 = vmatpush.msra.mxu0 0.0
      %408 = vmatpush.msra.mxu0 %v385
      %409 = vmatpush.msra.mxu0 %v383
      %410 = vmatmul.f32.gmra.mxu0 %v389
      %v411 = vpop.f32.mrf.mxu0
      %v412 = vadd.f32 0.0, %v411
      %413 = vmatmul.f32.gmra.mxu0 %v392
      %v414 = vpop.f32.mrf.mxu0
      %v415 = vadd.f32 0.0, %v414
      %416 = vdwg.mxu0
      %v417 = vadd.f32 %v380, %v412
      %v418 = vadd.f32 %v381, %v415
      %419 = vrot.lane.b32.xlu0 %v287, 120
      %v420 = vpop.permute.xlu0 %419
      %421 = vrot.lane.b32.xlu0 %v288, 120
      %v422 = vpop.permute.xlu0 %421
      %423 = vrot.lane.b32.xlu0 %v279, 88
      %v424 = vpop.permute.xlu0 %423
      %425 = vrot.lane.b32.xlu0 %v280, 88
      %v426 = vpop.permute.xlu0 %425
      %v427 = vsel %vm295, %v420, 0
      %v429 = vsel %vm295, %v422, 0
      %v431 = vsel %vm295, %v424, 0
      %v433 = vsel %vm295, %v426, 0
      %435 = vmatpush.xpose.msra.mxu0 0.0
      %436 = vmatpush.xpose.msra.mxu0 0.0
      %437 = vmatpush.xpose.msra.mxu0 0.0
      %438 = vmatpush.xpose.msra.mxu0 0.0
      %439 = vmatpush.xpose.msra.mxu0 0.0
      %440 = vmatpush.xpose.msra.mxu0 0.0
      %441 = vmatpush.xpose.msra.mxu0 0.0
      %442 = vmatpush.xpose.msra.mxu0 0.0
      %443 = vmatpush.xpose.msra.mxu0 0.0
      %444 = vmatpush.xpose.msra.mxu0 0.0
      %445 = vmatpush.xpose.msra.mxu0 0.0
      %446 = vmatpush.xpose.msra.mxu0 0.0
      %447 = vmatpush.xpose.msra.mxu0 0.0
      %448 = vmatpush.xpose.msra.mxu0 0.0
      %449 = vmatpush.xpose.msra.mxu0 %v433
      %450 = vmatpush.xpose.msra.mxu0 %v431
      %451 = vmatmul.f32.gmra.mxu0 %v427
      %v452 = vpop.f32.mrf.mxu0
      %v453 = vadd.f32 0.0, %v452
      %454 = vmatmul.f32.gmra.mxu0 %v429
      %v455 = vpop.f32.mrf.mxu0
      %v456 = vadd.f32 0.0, %v455
      %457 = vdwg.mxu0
      %v458 = vsel %vm329, %v453, -inf
      %459 = vmax.xlane.f32.xlu0 %v458
      %v460 = vpop.xlane.xlu0 %459
      %v461 = vsel %vm329, %v456, -inf
      %462 = vmax.xlane.f32.xlu0 %v461
      %v463 = vpop.xlane.xlu0 %462
      %v464 = vmax.f32 %v281, %v460
      %v465 = vmax.f32 %v282, %v463
      %v466 = vsub.f32 %v281, %v464
      %v467 = vsub.f32 %v282, %v465
      %v468 = vmul.f32 %v466, 1.442695
      %v469 = vpow.pop %v468
      %v470 = vmul.f32 %v467, 1.442695
      %v471 = vpow.pop %v470
      %473 = vset.pattern.permute.xlu0 1
      %474 = vperm.xlu0 %473, %v464
      %v475 = vpop.permute.xlu0 %474
      %478 = vset.pattern.permute.xlu0 1
      %479 = vperm.xlu0 %478, %v465
      %v480 = vpop.permute.xlu0 %479
      %v482 = vsub.f32 %v453, %v475
      %v483 = vsub.f32 %v456, %v480
      %v484 = vmul.f32 %v482, 1.442695
      %v485 = vpow.pop %v484
      %v486 = vmul.f32 %v483, 1.442695
      %v487 = vpow.pop %v486
      %v488 = vmul.f32 %v469, %v283
      %v489 = vmul.f32 %v471, %v284
      %v490 = vsel %vm329, %v485, 0.0
      %491 = vadd.xlane.f32.xlu0 %v490
      %v492 = vpop.xlane.xlu0 %491
      %v493 = vsel %vm329, %v487, 0.0
      %494 = vadd.xlane.f32.xlu0 %v493
      %v495 = vpop.xlane.xlu0 %494
      %v496 = vadd.f32 %v488, %v492
      %v497 = vadd.f32 %v489, %v495
      %499 = vset.pattern.permute.xlu0 1
      %500 = vperm.xlu0 %499, %v469
      %v501 = vpop.permute.xlu0 %500
      %504 = vset.pattern.permute.xlu0 1
      %505 = vperm.xlu0 %504, %v471
      %v506 = vpop.permute.xlu0 %505
      %v508 = vmul.f32 %v501, %v285
      %v509 = vmul.f32 %v506, %v286
      %510 = vrot.lane.b32.xlu0 %v279, 56
      %v511 = vpop.permute.xlu0 %510
      %512 = vrot.lane.b32.xlu0 %v280, 56
      %v513 = vpop.permute.xlu0 %512
      %v517 = vsel %vm329, %v485, 0
      %v520 = vsel %vm329, %v487, 0
      %522 = vmatpush.msra.mxu0 0.0
      %523 = vmatpush.msra.mxu0 0.0
      %524 = vmatpush.msra.mxu0 0.0
      %525 = vmatpush.msra.mxu0 0.0
      %526 = vmatpush.msra.mxu0 0.0
      %527 = vmatpush.msra.mxu0 0.0
      %528 = vmatpush.msra.mxu0 0.0
      %529 = vmatpush.msra.mxu0 0.0
      %530 = vmatpush.msra.mxu0 0.0
      %531 = vmatpush.msra.mxu0 0.0
      %532 = vmatpush.msra.mxu0 0.0
      %533 = vmatpush.msra.mxu0 0.0
      %534 = vmatpush.msra.mxu0 0.0
      %535 = vmatpush.msra.mxu0 0.0
      %536 = vmatpush.msra.mxu0 %v513
      %537 = vmatpush.msra.mxu0 %v511
      %538 = vmatmul.f32.gmra.mxu0 %v517
      %v539 = vpop.f32.mrf.mxu0
      %v540 = vadd.f32 0.0, %v539
      %541 = vmatmul.f32.gmra.mxu0 %v520
      %v542 = vpop.f32.mrf.mxu0
      %v543 = vadd.f32 0.0, %v542
      %544 = vdwg.mxu0
      %547 = vrot.lane.b32.xlu0 %v540, 8
      %v548 = vpop.permute.xlu0 %547
      %549 = vrot.lane.b32.xlu0 %v543, 8
      %v550 = vpop.permute.xlu0 %549
      %v553 = vadd.f32 %v508, %v548
      %v554 = vadd.f32 %v509, %v550
      %555 = vrot.lane.b32.xlu0 %v287, 112
      %v556 = vpop.permute.xlu0 %555
      %557 = vrot.lane.b32.xlu0 %v288, 112
      %v558 = vpop.permute.xlu0 %557
      %559 = vrot.lane.b32.xlu0 %v279, 80
      %v560 = vpop.permute.xlu0 %559
      %561 = vrot.lane.b32.xlu0 %v280, 80
      %v562 = vpop.permute.xlu0 %561
      %v563 = vsel %vm295, %v556, 0
      %v565 = vsel %vm295, %v558, 0
      %v567 = vsel %vm295, %v560, 0
      %v569 = vsel %vm295, %v562, 0
      %571 = vmatpush.xpose.msra.mxu0 0.0
      %572 = vmatpush.xpose.msra.mxu0 0.0
      %573 = vmatpush.xpose.msra.mxu0 0.0
      %574 = vmatpush.xpose.msra.mxu0 0.0
      %575 = vmatpush.xpose.msra.mxu0 0.0
      %576 = vmatpush.xpose.msra.mxu0 0.0
      %577 = vmatpush.xpose.msra.mxu0 0.0
      %578 = vmatpush.xpose.msra.mxu0 0.0
      %579 = vmatpush.xpose.msra.mxu0 0.0
      %580 = vmatpush.xpose.msra.mxu0 0.0
      %581 = vmatpush.xpose.msra.mxu0 0.0
      %582 = vmatpush.xpose.msra.mxu0 0.0
      %583 = vmatpush.xpose.msra.mxu0 0.0
      %584 = vmatpush.xpose.msra.mxu0 0.0
      %585 = vmatpush.xpose.msra.mxu0 %v569
      %586 = vmatpush.xpose.msra.mxu0 %v567
      %587 = vmatmul.f32.gmra.mxu0 %v563
      %v588 = vpop.f32.mrf.mxu0
      %v589 = vadd.f32 0.0, %v588
      %590 = vmatmul.f32.gmra.mxu0 %v565
      %v591 = vpop.f32.mrf.mxu0
      %v592 = vadd.f32 0.0, %v591
      %593 = vdwg.mxu0
      %v594 = vsel %vm329, %v589, -inf
      %595 = vmax.xlane.f32.xlu0 %v594
      %v596 = vpop.xlane.xlu0 %595
      %v597 = vsel %vm329, %v592, -inf
      %598 = vmax.xlane.f32.xlu0 %v597
      %v599 = vpop.xlane.xlu0 %598
      %v600 = vmax.f32 %v281, %v596
      %v601 = vmax.f32 %v282, %v599
      %v602 = vsub.f32 %v281, %v600
      %v603 = vsub.f32 %v282, %v601
      %v604 = vmul.f32 %v602, 1.442695
      %v605 = vpow.pop %v604
      %v606 = vmul.f32 %v603, 1.442695
      %v607 = vpow.pop %v606
      %609 = vset.pattern.permute.xlu0 2
      %610 = vperm.xlu0 %609, %v600
      %v611 = vpop.permute.xlu0 %610
      %614 = vset.pattern.permute.xlu0 2
      %615 = vperm.xlu0 %614, %v601
      %v616 = vpop.permute.xlu0 %615
      %v618 = vsub.f32 %v589, %v611
      %v619 = vsub.f32 %v592, %v616
      %v620 = vmul.f32 %v618, 1.442695
      %v621 = vpow.pop %v620
      %v622 = vmul.f32 %v619, 1.442695
      %v623 = vpow.pop %v622
      %v624 = vmul.f32 %v605, %v283
      %v625 = vmul.f32 %v607, %v284
      %v626 = vsel %vm329, %v621, 0.0
      %627 = vadd.xlane.f32.xlu0 %v626
      %v628 = vpop.xlane.xlu0 %627
      %v629 = vsel %vm329, %v623, 0.0
      %630 = vadd.xlane.f32.xlu0 %v629
      %v631 = vpop.xlane.xlu0 %630
      %v632 = vadd.f32 %v624, %v628
      %v633 = vadd.f32 %v625, %v631
      %635 = vset.pattern.permute.xlu0 2
      %636 = vperm.xlu0 %635, %v605
      %v637 = vpop.permute.xlu0 %636
      %640 = vset.pattern.permute.xlu0 2
      %641 = vperm.xlu0 %640, %v607
      %v642 = vpop.permute.xlu0 %641
      %v644 = vmul.f32 %v637, %v285
      %v645 = vmul.f32 %v642, %v286
      %646 = vrot.lane.b32.xlu0 %v279, 48
      %v647 = vpop.permute.xlu0 %646
      %648 = vrot.lane.b32.xlu0 %v280, 48
      %v649 = vpop.permute.xlu0 %648
      %v653 = vsel %vm329, %v621, 0
      %v656 = vsel %vm329, %v623, 0
      %658 = vmatpush.msra.mxu0 0.0
      %659 = vmatpush.msra.mxu0 0.0
      %660 = vmatpush.msra.mxu0 0.0
      %661 = vmatpush.msra.mxu0 0.0
      %662 = vmatpush.msra.mxu0 0.0
      %663 = vmatpush.msra.mxu0 0.0
      %664 = vmatpush.msra.mxu0 0.0
      %665 = vmatpush.msra.mxu0 0.0
      %666 = vmatpush.msra.mxu0 0.0
      %667 = vmatpush.msra.mxu0 0.0
      %668 = vmatpush.msra.mxu0 0.0
      %669 = vmatpush.msra.mxu0 0.0
      %670 = vmatpush.msra.mxu0 0.0
      %671 = vmatpush.msra.mxu0 0.0
      %672 = vmatpush.msra.mxu0 %v649
      %673 = vmatpush.msra.mxu0 %v647
      %674 = vmatmul.f32.gmra.mxu0 %v653
      %v675 = vpop.f32.mrf.mxu0
      %v676 = vadd.f32 0.0, %v675
      %677 = vmatmul.f32.gmra.mxu0 %v656
      %v678 = vpop.f32.mrf.mxu0
      %v679 = vadd.f32 0.0, %v678
      %680 = vdwg.mxu0
      %683 = vrot.lane.b32.xlu0 %v676, 16
      %v684 = vpop.permute.xlu0 %683
      %685 = vrot.lane.b32.xlu0 %v679, 16
      %v686 = vpop.permute.xlu0 %685
      %v689 = vadd.f32 %v644, %v684
      %v690 = vadd.f32 %v645, %v686
      %691 = vrot.lane.b32.xlu0 %v287, 104
      %v692 = vpop.permute.xlu0 %691
      %693 = vrot.lane.b32.xlu0 %v288, 104
      %v694 = vpop.permute.xlu0 %693
      %695 = vrot.lane.b32.xlu0 %v279, 72
      %v696 = vpop.permute.xlu0 %695
      %697 = vrot.lane.b32.xlu0 %v280, 72
      %v698 = vpop.permute.xlu0 %697
      %v699 = vsel %vm295, %v692, 0
      %v701 = vsel %vm295, %v694, 0
      %v703 = vsel %vm295, %v696, 0
      %v705 = vsel %vm295, %v698, 0
      %707 = vmatpush.xpose.msra.mxu0 0.0
      %708 = vmatpush.xpose.msra.mxu0 0.0
      %709 = vmatpush.xpose.msra.mxu0 0.0
      %710 = vmatpush.xpose.msra.mxu0 0.0
      %711 = vmatpush.xpose.msra.mxu0 0.0
      %712 = vmatpush.xpose.msra.mxu0 0.0
      %713 = vmatpush.xpose.msra.mxu0 0.0
      %714 = vmatpush.xpose.msra.mxu0 0.0
      %715 = vmatpush.xpose.msra.mxu0 0.0
      %716 = vmatpush.xpose.msra.mxu0 0.0
      %717 = vmatpush.xpose.msra.mxu0 0.0
      %718 = vmatpush.xpose.msra.mxu0 0.0
      %719 = vmatpush.xpose.msra.mxu0 0.0
      %720 = vmatpush.xpose.msra.mxu0 0.0
      %721 = vmatpush.xpose.msra.mxu0 %v705
      %722 = vmatpush.xpose.msra.mxu0 %v703
      %723 = vmatmul.f32.gmra.mxu0 %v699
      %v724 = vpop.f32.mrf.mxu0
      %v725 = vadd.f32 0.0, %v724
      %726 = vmatmul.f32.gmra.mxu0 %v701
      %v727 = vpop.f32.mrf.mxu0
      %v728 = vadd.f32 0.0, %v727
      %729 = vdwg.mxu0
      %v730 = vsel %vm329, %v725, -inf
      %731 = vmax.xlane.f32.xlu0 %v730
      %v732 = vpop.xlane.xlu0 %731
      %v733 = vsel %vm329, %v728, -inf
      %734 = vmax.xlane.f32.xlu0 %v733
      %v735 = vpop.xlane.xlu0 %734
      %v736 = vmax.f32 %v281, %v732
      %v737 = vmax.f32 %v282, %v735
      %v738 = vsub.f32 %v281, %v736
      %v739 = vsub.f32 %v282, %v737
      %v740 = vmul.f32 %v738, 1.442695
      %v741 = vpow.pop %v740
      %v742 = vmul.f32 %v739, 1.442695
      %v743 = vpow.pop %v742
      %745 = vset.pattern.permute.xlu0 3
      %746 = vperm.xlu0 %745, %v736
      %v747 = vpop.permute.xlu0 %746
      %750 = vset.pattern.permute.xlu0 3
      %751 = vperm.xlu0 %750, %v737
      %v752 = vpop.permute.xlu0 %751
      %v754 = vsub.f32 %v725, %v747
      %v755 = vsub.f32 %v728, %v752
      %v756 = vmul.f32 %v754, 1.442695
      %v757 = vpow.pop %v756
      %v758 = vmul.f32 %v755, 1.442695
      %v759 = vpow.pop %v758
      %v760 = vmul.f32 %v741, %v283
      %v761 = vmul.f32 %v743, %v284
      %v762 = vsel %vm329, %v757, 0.0
      %763 = vadd.xlane.f32.xlu0 %v762
      %v764 = vpop.xlane.xlu0 %763
      %v765 = vsel %vm329, %v759, 0.0
      %766 = vadd.xlane.f32.xlu0 %v765
      %v767 = vpop.xlane.xlu0 %766
      %v768 = vadd.f32 %v760, %v764
      %v769 = vadd.f32 %v761, %v767
      %771 = vset.pattern.permute.xlu0 3
      %772 = vperm.xlu0 %771, %v741
      %v773 = vpop.permute.xlu0 %772
      %776 = vset.pattern.permute.xlu0 3
      %777 = vperm.xlu0 %776, %v743
      %v778 = vpop.permute.xlu0 %777
      %v780 = vmul.f32 %v773, %v285
      %v781 = vmul.f32 %v778, %v286
      %782 = vrot.lane.b32.xlu0 %v279, 40
      %v783 = vpop.permute.xlu0 %782
      %784 = vrot.lane.b32.xlu0 %v280, 40
      %v785 = vpop.permute.xlu0 %784
      %v789 = vsel %vm329, %v757, 0
      %v792 = vsel %vm329, %v759, 0
      %794 = vmatpush.msra.mxu0 0.0
      %795 = vmatpush.msra.mxu0 0.0
      %796 = vmatpush.msra.mxu0 0.0
      %797 = vmatpush.msra.mxu0 0.0
      %798 = vmatpush.msra.mxu0 0.0
      %799 = vmatpush.msra.mxu0 0.0
      %800 = vmatpush.msra.mxu0 0.0
      %801 = vmatpush.msra.mxu0 0.0
      %802 = vmatpush.msra.mxu0 0.0
      %803 = vmatpush.msra.mxu0 0.0
      %804 = vmatpush.msra.mxu0 0.0
      %805 = vmatpush.msra.mxu0 0.0
      %806 = vmatpush.msra.mxu0 0.0
      %807 = vmatpush.msra.mxu0 0.0
      %808 = vmatpush.msra.mxu0 %v785
      %809 = vmatpush.msra.mxu0 %v783
      %810 = vmatmul.f32.gmra.mxu0 %v789
      %v811 = vpop.f32.mrf.mxu0
      %v812 = vadd.f32 0.0, %v811
      %813 = vmatmul.f32.gmra.mxu0 %v792
      %v814 = vpop.f32.mrf.mxu0
      %v815 = vadd.f32 0.0, %v814
      %816 = vdwg.mxu0
      %819 = vrot.lane.b32.xlu0 %v812, 24
      %v820 = vpop.permute.xlu0 %819
      %821 = vrot.lane.b32.xlu0 %v815, 24
      %v822 = vpop.permute.xlu0 %821
      %v825 = vadd.f32 %v780, %v820
      %v826 = vadd.f32 %v781, %v822
      %vm827 = vcmask 7168
      %v828 = vsel %vm827, %v336, %v464
      %v829 = vsel %vm827, %v337, %v465
      %vm830 = vcmask 15360
      %v831 = vsel %vm830, %v828, %v600
      %v832 = vsel %vm830, %v829, %v601
      %vm833 = vcmask 23552
      %v834 = vsel %vm833, %v831, %v736
      %v835 = vsel %vm833, %v832, %v737
      %vm836 = vcmask 31744
      %837 = vst.msk [vmem:[#allocation2] sm:$0xff] %vm836, %v834
      %838 = vst.msk [vmem:[#allocation2 + $0x8] sm:$0xff] %vm836, %v835
      %v839 = vsel %vm827, %v368, %v496
      %v840 = vsel %vm827, %v369, %v497
      %v841 = vsel %vm830, %v839, %v632
      %v842 = vsel %vm830, %v840, %v633
      %v843 = vsel %vm833, %v841, %v768
      %v844 = vsel %vm833, %v842, %v769
      %845 = vst.msk [vmem:[#allocation3] sm:$0xff] %vm836, %v843
      %846 = vst.msk [vmem:[#allocation3 + $0x8] sm:$0xff] %vm836, %v844
      %v847 = vsel %vm295, %v417, %v553
      %v848 = vsel %vm295, %v418, %v554
      %v849 = vsel %vm329, %v847, %v689
      %v850 = vsel %vm329, %v848, %v690
      %vm851 = vcmask 195584
      %v852 = vsel %vm851, %v849, %v825
      %v853 = vsel %vm851, %v850, %v826
      %vm854 = vcmask 261120
      %855 = vst.msk [vmem:[#allocation4] sm:$0xff] %vm854, %v852
      %856 = vst.msk [vmem:[#allocation4 + $0x8] sm:$0xff] %vm854, %v853
      %p857 = scmp.eq.s32.totalorder %s29, 1
      // Predicated region
      $region33: #{ar_attention_pallas.10} parent=27 // pred_check
        %p858 = pneg %p857
      $region34: #{ar_attention_pallas.10} parent=27 // pred_check_branch
        %860 = sbr.rel (%p858) target = $region36
      $region35: #{ar_attention_pallas.10} parent=27 // pred_region
        %v861 = vld [vmem:[#allocation3] sm:$0xff]
        %v862 = vld [vmem:[#allocation3 + $0x8] sm:$0xff]
        %v863 = vrcp.pop %v861
        %v864 = vrcp.pop %v862
        %v865 = vld [vmem:[#allocation4] sm:$0xff]
        %v866 = vld [vmem:[#allocation4 + $0x8] sm:$0xff]
        %868 = vset.pattern.permute.xlu0 0
        %869 = vperm.xlu0 %868, %v863
        %v870 = vpop.permute.xlu0 %869
        %873 = vset.pattern.permute.xlu0 0
        %874 = vperm.xlu0 %873, %v864
        %v875 = vpop.permute.xlu0 %874
        %v877 = vmul.f32 %v865, %v870
        %v878 = vmul.f32 %v866, %v875
        %879 = vset.pattern.permute.xlu0 1
        %880 = vperm.xlu0 %879, %v863
        %v881 = vpop.permute.xlu0 %880
        %883 = vset.pattern.permute.xlu0 1
        %884 = vperm.xlu0 %883, %v864
        %v885 = vpop.permute.xlu0 %884
        %v887 = vmul.f32 %v865, %v881
        %v888 = vmul.f32 %v866, %v885
        %889 = vset.pattern.permute.xlu0 2
        %890 = vperm.xlu0 %889, %v863
        %v891 = vpop.permute.xlu0 %890
        %893 = vset.pattern.permute.xlu0 2
        %894 = vperm.xlu0 %893, %v864
        %v895 = vpop.permute.xlu0 %894
        %v897 = vmul.f32 %v865, %v891
        %v898 = vmul.f32 %v866, %v895
        %899 = vset.pattern.permute.xlu0 3
        %900 = vperm.xlu0 %899, %v863
        %v901 = vpop.permute.xlu0 %900
        %903 = vset.pattern.permute.xlu0 3
        %904 = vperm.xlu0 %903, %v864
        %v905 = vpop.permute.xlu0 %904
        %v907 = vmul.f32 %v865, %v901
        %v908 = vmul.f32 %v866, %v905
        %v909 = vsel %vm295, %v877, %v887
        %v910 = vsel %vm295, %v878, %v888
        %v911 = vsel %vm329, %v909, %v897
        %v912 = vsel %vm329, %v910, %v898
        %v913 = vsel %vm851, %v911, %v907
        %v914 = vsel %vm851, %v912, %v908
        %915 = vst.msk [vmem:[%s264] sm:$0xff] %vm854, %v913
        %916 = vst.msk [vmem:[%s264 + $0x8] sm:$0xff] %vm854, %v914
      $region36: #{ar_attention_pallas.10} parent=27 // pred_fallthru
        _
      %p917 = scmp.lt.s32.totalorder %s27, 1
      %s918 = scalar_select %p917, %s27, 1
      %p919 = scmp.lt.s32.totalorder %s28, 3
      %s920 = scalar_select %p919, %s28, 3
      %s921 = smul.addr %s920, 2
      %s922 = smul.addr %s918, 8
      %s923 = sadd.s32 %s921, %s922
      %s924 = smul.addr %s923, 8
      %s925 = scalar_lea.vmem %s3, %s924
      // Predicated region
      $region37: #{ar_attention_pallas.10} parent=27 // pred_check
        %p926 = pneg %p127
      $region38: #{ar_attention_pallas.10} parent=27 // pred_check_branch
        %928 = sbr.rel (%p926) target = $region40
      $region39: #{ar_attention_pallas.10} parent=27 // pred_region
        _
      $region40: #{ar_attention_pallas.10} parent=27 // pred_fallthru
        _
    $region28: #{ar_attention_pallas.10} parent=5 // pred_fallthru
      _
    %p929 = scmp.le.s32.totalorder 2, %s17
    // Predicated region
    $region41: #{ar_attention_pallas.10} parent=5 // pred_check
      %p930 = pneg %p929
    $region42: #{ar_attention_pallas.10} parent=5 // pred_check_branch
      %932 = sbr.rel (%p930) target = $region44
    $region43: #{ar_attention_pallas.10} parent=5 // pred_region
      %s933 = ssub.s32 %s17, 2
      // Predicated region
      $region45: #{ar_attention_pallas.10} parent=43 // pred_check
        %p934 = pneg %p133
      $region46: #{ar_attention_pallas.10} parent=43 // pred_check_branch
        %936 = sbr.rel (%p934) target = $region48
      $region47: #{ar_attention_pallas.10} parent=43 // pred_region
        %p937 = scmp.lt.s32.totalorder %s30, 1
        %s938 = scalar_select %p937, %s30, 1
        %p939 = scmp.lt.s32.totalorder %s31, 3
        %s940 = scalar_select %p939, %s31, 3
        %s941 = smul.addr %s940, 2
        %s942 = smul.addr %s938, 8
        %s943 = sadd.s32 %s941, %s942
        %s944 = smul.addr %s943, 8
        %s945 = scalar_lea.vmem %s3, %s944
      $region48: #{ar_attention_pallas.10} parent=43 // pred_fallthru
        _
    $region44: #{ar_attention_pallas.10} parent=5 // pred_fallthru
      _
  $region6: #{ar_attention_pallas.10} parent=0 // loop_footer
    %s21 = sadd.s32 1, %s17
  $region7: #{ar_attention_pallas.10} parent=0 // loop_footer_branch
    %16 = sbr.rel target = $region3
  $region8: #{ar_attention_pallas.10} parent=0 // loop_exit
    _

// kernel: ar_attention_pallas.8
$region0: #{ar_attention_pallas.8}
  #allocation0 [shape = 'u32[]', space=smem, size = 0x4, offset = 0x4, fixed_abs, tag = 'smem constant byte address 0x4 - core index']
  #allocation1 [shape = 'u32[72,128]{1,0:T(1,128)}', space=vmem, size = 0x9000, scoped, tag = 'internal scratch']
  %s0 = inlined_call_operand.vmem [shape: f32[2,10,10,32], index: 0, kind: input, shape index: {}]
  %s1 = inlined_call_operand.vmem [shape: f32[3,3,32], index: 1, kind: input, shape index: {}]
  %s2 = inlined_call_operand.vmem [shape: f32[1,32], index: 2, kind: input, shape index: {}]
  %s3 = inlined_call_operand.vmem [shape: f32[2,8,8,32], index: 3, kind: output, shape index: {}]
  %s4 = sld [smem:[#allocation0]]
  $region45: #{ar_attention_pallas.8} parent=0
    _
  %s6 = ssub.s32 1, %s4
  %s7 = scalar_select 0, %s6, %s4
  loop: start=0, step=1, limit=4
  $region2: #{ar_attention_pallas.8} parent=0 // loop_pre_header
    _
  $region3: #{ar_attention_pallas.8} parent=0 // loop_header
    %s9 = sphi 0, %s13
    %p10 = scmp.ge.s32.totalorder %s9, 4
    %s19 = sphi 0, %s21
    %s22 = sphi 0, %s19
    %s23 = sphi 0, %s22
    %s39 = sphi 0, %s23
    %s43 = sphi 0, %s43
    %s45 = sphi 0, %s43
    %s46 = sphi 0, %s45
    %s60 = sphi 0, %s46
    %s64 = sphi 0, %s64
    %s66 = sphi 0, %s64
    %s67 = sphi 0, %s66
    %s81 = sphi 0, %s67
    %s87 = sphi 0, %s89
    %s90 = sphi 0, %s87
    %s91 = sphi 0, %s90
    %s107 = sphi 0, %s91
  $region4: #{ar_attention_pallas.8} parent=0 // loop_header_branch
    %12 = sbr.rel (%p10) target = $region8
  $region5: #{ar_attention_pallas.8} parent=0 // loop_body
    %s14 = ssub.s32 %s9, 1
    %s15 = ssub.s32 %s9, 2
    %s16 = sadd.s32 %s9, 1
    %s17 = ssub.s32 %s9, %s16
    %p18 = scmp.eq.s32.totalorder %s17, 0
    %s20 = sadd.s32 %s19, 1
    %s21 = scalar_select %p18, %s19, %s20
    %p24 = pneg %p18
    %p25 = scmp.eq.s32.totalorder %s9, 1
    %p26 = por %p24, %p25
    %p27 = scmp.ne.s32.totalorder %s19, %s22
    %p28 = scmp.eq.s32.totalorder %s9, 0
    %p29 = por %p27, %p28
    %p30 = scmp.ne.s32.totalorder %s19, %s22
    %p31 = scmp.eq.s32.totalorder %s14, 1
    %p32 = por %p30, %p31
    %p33 = scmp.ne.s32.totalorder %s22, %s23
    %p34 = scmp.eq.s32.totalorder %s14, 0
    %p35 = por %p33, %p34
    %p36 = scmp.ne.s32.totalorder %s22, %s23
    %p37 = scmp.eq.s32.totalorder %s15, 1
    %p38 = por %p36, %p37
    %p40 = scmp.ne.s32.totalorder %s23, %s39
    %p41 = scmp.eq.s32.totalorder %s15, 0
    %p42 = por %p40, %p41
    %s44 = sadd.s32 %s43, 1
    %p47 = scmp.eq.s32.totalorder %s9, 1
    %p48 = scmp.ne.s32.totalorder %s43, %s45
    %p49 = scmp.eq.s32.totalorder %s9, 0
    %p50 = por %p48, %p49
    %p51 = scmp.ne.s32.totalorder %s43, %s45
    %p52 = scmp.eq.s32.totalorder %s14, 1
    %p53 = por %p51, %p52
    %p54 = scmp.ne.s32.totalorder %s45, %s46
    %p55 = scmp.eq.s32.totalorder %s14, 0
    %p56 = por %p54, %p55
    %p57 = scmp.ne.s32.totalorder %s45, %s46
    %p58 = scmp.eq.s32.totalorder %s15, 1
    %p59 = por %p57, %p58
    %p61 = scmp.ne.s32.totalorder %s46, %s60
    %p62 = scmp.eq.s32.totalorder %s15, 0
    %p63 = por %p61, %p62
    %s65 = sadd.s32 %s64, 1
    %p68 = scmp.eq.s32.totalorder %s9, 1
    %p69 = scmp.ne.s32.totalorder %s64, %s66
    %p70 = scmp.eq.s32.totalorder %s9, 0
    %p71 = por %p69, %p70
    %p72 = scmp.ne.s32.totalorder %s64, %s66
    %p73 = scmp.eq.s32.totalorder %s14, 1
    %p74 = por %p72, %p73
    %p75 = scmp.ne.s32.totalorder %s66, %s67
    %p76 = scmp.eq.s32.totalorder %s14, 0
    %p77 = por %p75, %p76
    %p78 = scmp.ne.s32.totalorder %s66, %s67
    %p79 = scmp.eq.s32.totalorder %s15, 1
    %p80 = por %p78, %p79
    %p82 = scmp.ne.s32.totalorder %s67, %s81
    %p83 = scmp.eq.s32.totalorder %s15, 0
    %p84 = por %p82, %p83
    %s85 = ssub.s32 %s9, %s16
    %p86 = scmp.eq.s32.totalorder %s85, 0
    %s88 = sadd.s32 %s87, 1
    %s89 = scalar_select %p86, %s87, %s88
    %p92 = pneg %p86
    %p93 = scmp.eq.s32.totalorder %s9, 1
    %p94 = por %p92, %p93
    %p95 = scmp.ne.s32.totalorder %s87, %s90
    %p96 = scmp.eq.s32.totalorder %s9, 0
    %p97 = por %p95, %p96
    %p98 = scmp.ne.s32.totalorder %s87, %s90
    %p99 = scmp.eq.s32.totalorder %s14, 1
    %p100 = por %p98, %p99
    %p101 = scmp.ne.s32.totalorder %s90, %s91
    %p102 = scmp.eq.s32.totalorder %s14, 0
    %p103 = por %p101, %p102
    %p104 = scmp.ne.s32.totalorder %s90, %s91
    %p105 = scmp.eq.s32.totalorder %s15, 1
    %p106 = por %p104, %p105
    %p108 = scmp.ne.s32.totalorder %s91, %s107
    %p109 = scmp.eq.s32.totalorder %s15, 0
    %p110 = por %p108, %p109
    %p111 = scmp.le.s32.totalorder 1, %s9
    %p112 = scmp.lt.s32.totalorder %s9, 3
    %p113 = pnand %p111, %p112
    %p114 = pneg %p113
    // Predicated region
    $region9: #{ar_attention_pallas.8} parent=5 // pred_check
      _
    $region10: #{ar_attention_pallas.8} parent=5 // pred_check_branch
      %116 = sbr.rel (%p113) target = $region12
    $region11: #{ar_attention_pallas.8} parent=5 // pred_region
      %s117 = ssub.s32 %s9, 1
      // Predicated region
      $region13: #{ar_attention_pallas.8} parent=11 // pred_check
        %p118 = pneg %p56
      $region14: #{ar_attention_pallas.8} parent=11 // pred_check_branch
        %120 = sbr.rel (%p118) target = $region16
      $region15: #{ar_attention_pallas.8} parent=11 // pred_region
        _
      $region16: #{ar_attention_pallas.8} parent=11 // pred_fallthru
        _
      // Predicated region
      $region17: #{ar_attention_pallas.8} parent=11 // pred_check
        %p121 = pneg %p77
      $region18: #{ar_attention_pallas.8} parent=11 // pred_check_branch
        %123 = sbr.rel (%p121) target = $region20
      $region19: #{ar_attention_pallas.8} parent=11 // pred_region
        _
      $region20: #{ar_attention_pallas.8} parent=11 // pred_fallthru
        _
    $region12: #{ar_attention_pallas.8} parent=5 // pred_fallthru
      _
    %p124 = scmp.lt.s32.totalorder %s9, 2
    // Predicated region
    $region21: #{ar_attention_pallas.8} parent=5 // pred_check
      %p125 = pneg %p124
    $region22: #{ar_attention_pallas.8} parent=5 // pred_check_branch
      %127 = sbr.rel (%p125) target = $region24
    $region23: #{ar_attention_pallas.8} parent=5 // pred_region
      // Predicated region
      $region25: #{ar_attention_pallas.8} parent=23 // pred_check
        %p128 = pneg %p29
      $region26: #{ar_attention_pallas.8} parent=23 // pred_check_branch
        %130 = sbr.rel (%p128) target = $region28
      $region27: #{ar_attention_pallas.8} parent=23 // pred_region
        %p131 = scmp.lt.s32.totalorder %s9, 1
        %s132 = scalar_select %p131, %s9, 1
        %s133 = smul.addr %s132, 20
        %s134 = smul.addr %s133, 8
        %s135 = scalar_lea.vmem %s0, %s134
      $region28: #{ar_attention_pallas.8} parent=23 // pred_fallthru
        _
    $region24: #{ar_attention_pallas.8} parent=5 // pred_fallthru
      _
    %p136 = scmp.le.s32.totalorder 1, %s9
    %p137 = scmp.lt.s32.totalorder %s9, 3
    %p138 = pnand %p136, %p137
    %p139 = pneg %p138
    // Predicated region
    $region29: #{ar_attention_pallas.8} parent=5 // pred_check
      _
    $region30: #{ar_attention_pallas.8} parent=5 // pred_check_branch
      %141 = sbr.rel (%p138) target = $region32
    $region31: #{ar_attention_pallas.8} parent=5 // pred_region
      %s142 = ssub.s32 %s9, 1
      %p143 = scmp.lt.s32.totalorder %s14, 1
      %s144 = scalar_select %p143, %s14, 1
      %s145 = smul.addr %s144, 20
      %s146 = smul.addr %s145, 8
      %s147 = scalar_lea.vmem %s0, %s146
      %p148 = pneg %p35
      %p149 = pneg %p32
      %p150 = pneg %p56
      %p151 = pneg %p53
      %p152 = pneg %p77
      %p153 = pneg %p74
      %p154 = pneg %p103
      %p155 = pneg %p100
      %p156 = scmp.lt.s32.totalorder %s14, 1
      %s157 = scalar_select %p156, %s14, 1
      %s158 = smul.addr %s157, 8
      %s159 = smul.addr %s158, 8
      %s160 = scalar_lea.vmem %s3, %s159
      %p161 = scmp.lt.s32.totalorder %s14, 1
      %s162 = scalar_select %p161, %s14, 1
      %s163 = smul.addr %s162, 20
      %s164 = smul.addr %s163, 8
      %s165 = scalar_lea.vmem %s0, %s164
      %p166 = scmp.lt.s32.totalorder %s14, 1
      %s167 = scalar_select %p166, %s14, 1
      %s168 = smul.addr %s167, 8
      %s169 = smul.addr %s168, 8
      %s170 = scalar_lea.vmem %s3, %s169
      %v171 = vld [vmem:[%s1] sm:$0x7]
      %v172 = vld [vmem:[%s1 + $0x4] sm:$0x7]
      %v173 = vld [vmem:[%s1 + $0x8] sm:$0x7]
      %v174 = vld [vmem:[%s165] sm:$0xff]
      %v175 = vld [vmem:[%s165 + $0x10] sm:$0xff]
      %v176 = vld [vmem:[%s165 + $0x20] sm:$0xff]
      %v177 = vld [vmem:[%s165 + $0x30] sm:$0xff]
      %v178 = vld [vmem:[%s165 + $0x40] sm:$0xff]
      %v179 = vld [vmem:[%s165 + $0x50] sm:$0xff]
      %v180 = vld [vmem:[%s165 + $0x60] sm:$0xff]
      %v181 = vld [vmem:[%s165 + $0x70] sm:$0xff]
      %v182 = vperm.slane %v171, 0
      %v183 = vmul.f32 %v174, %v182
      %v184 = vmul.f32 %v175, %v182
      %v185 = vmul.f32 %v176, %v182
      %v186 = vmul.f32 %v177, %v182
      %v187 = vmul.f32 %v178, %v182
      %v188 = vmul.f32 %v179, %v182
      %v189 = vmul.f32 %v180, %v182
      %v190 = vmul.f32 %v181, %v182
      %v191 = vadd.f32 %v183, 0.0
      %v192 = vadd.f32 %v184, 0.0
      %v193 = vadd.f32 %v185, 0.0
      %v194 = vadd.f32 %v186, 0.0
      %v195 = vadd.f32 %v187, 0.0
      %v196 = vadd.f32 %v188, 0.0
      %v197 = vadd.f32 %v189, 0.0
      %v198 = vadd.f32 %v190, 0.0
      %v199 = vld [vmem:[%s165 + $0x1] sm:$0xff]
      %v200 = vld [vmem:[%s165 + $0x11] sm:$0xff]
      %v201 = vld [vmem:[%s165 + $0x21] sm:$0xff]
      %v202 = vld [vmem:[%s165 + $0x31] sm:$0xff]
      %v203 = vld [vmem:[%s165 + $0x41] sm:$0xff]
      %v204 = vld [vmem:[%s165 + $0x51] sm:$0xff]
      %v205 = vld [vmem:[%s165 + $0x61] sm:$0xff]
      %v206 = vld [vmem:[%s165 + $0x71] sm:$0xff]
      %v207 = vperm.slane %v171, 1
      %v208 = vmul.f32 %v199, %v207
      %v209 = vmul.f32 %v200, %v207
      %v210 = vmul.f32 %v201, %v207
      %v211 = vmul.f32 %v202, %v207
      %v212 = vmul.f32 %v203, %v207
      %v213 = vmul.f32 %v204, %v207
      %v214 = vmul.f32 %v205, %v207
      %v215 = vmul.f32 %v206, %v207
      %v216 = vadd.f32 %v191, %v208
      %v217 = vadd.f32 %v192, %v209
      %v218 = vadd.f32 %v193, %v210
      %v219 = vadd.f32 %v194, %v211
      %v220 = vadd.f32 %v195, %v212
      %v221 = vadd.f32 %v196, %v213
      %v222 = vadd.f32 %v197, %v214
      %v223 = vadd.f32 %v198, %v215
      %v224 = vld [vmem:[%s165 + $0x2] sm:$0xff]
      %v225 = vld [vmem:[%s165 + $0x12] sm:$0xff]
      %v226 = vld [vmem:[%s165 + $0x22] sm:$0xff]
      %v227 = vld [vmem:[%s165 + $0x32] sm:$0xff]
      %v228 = vld [vmem:[%s165 + $0x42] sm:$0xff]
      %v229 = vld [vmem:[%s165 + $0x52] sm:$0xff]
      %v230 = vld [vmem:[%s165 + $0x62] sm:$0xff]
      %v231 = vld [vmem:[%s165 + $0x72] sm:$0xff]
      %v232 = vperm.slane %v171, 2
      %v233 = vmul.f32 %v224, %v232
      %v234 = vmul.f32 %v225, %v232
      %v235 = vmul.f32 %v226, %v232
      %v236 = vmul.f32 %v227, %v232
      %v237 = vmul.f32 %v228, %v232
      %v238 = vmul.f32 %v229, %v232
      %v239 = vmul.f32 %v230, %v232
      %v240 = vmul.f32 %v231, %v232
      %v241 = vadd.f32 %v216, %v233
      %v242 = vadd.f32 %v217, %v234
      %v243 = vadd.f32 %v218, %v235
      %v244 = vadd.f32 %v219, %v236
      %v245 = vadd.f32 %v220, %v237
      %v246 = vadd.f32 %v221, %v238
      %v247 = vadd.f32 %v222, %v239
      %v248 = vadd.f32 %v223, %v240
      %s249 = scalar_lea.vmem %s165, 16
      %v250 = vld [vmem:[%s249] sm:$0xff]
      %v251 = vld [vmem:[%s249 + $0x10] sm:$0xff]
      %v252 = vld [vmem:[%s249 + $0x20] sm:$0xff]
      %v253 = vld [vmem:[%s249 + $0x30] sm:$0xff]
      %v254 = vld [vmem:[%s249 + $0x40] sm:$0xff]
      %v255 = vld [vmem:[%s249 + $0x50] sm:$0xff]
      %v256 = vld [vmem:[%s249 + $0x60] sm:$0xff]
      %v257 = vld [vmem:[%s249 + $0x70] sm:$0xff]
      %v258 = vperm.slane %v172, 0
      %v259 = vmul.f32 %v250, %v258
      %v260 = vmul.f32 %v251, %v258
      %v261 = vmul.f32 %v252, %v258
      %v262 = vmul.f32 %v253, %v258
      %v263 = vmul.f32 %v254, %v258
      %v264 = vmul.f32 %v255, %v258
      %v265 = vmul.f32 %v256, %v258
      %v266 = vmul.f32 %v257, %v258
      %v267 = vadd.f32 %v241, %v259
      %v268 = vadd.f32 %v242, %v260
      %v269 = vadd.f32 %v243, %v261
      %v270 = vadd.f32 %v244, %v262
      %v271 = vadd.f32 %v245, %v263
      %v272 = vadd.f32 %v246, %v264
      %v273 = vadd.f32 %v247, %v265
      %v274 = vadd.f32 %v248, %v266
      %v275 = vld [vmem:[%s249 + $0x1] sm:$0xff]
      %v276 = vld [vmem:[%s249 + $0x11] sm:$0xff]
      %v277 = vld [vmem:[%s249 + $0x21] sm:$0xff]
      %v278 = vld [vmem:[%s249 + $0x31] sm:$0xff]
      %v279 = vld [vmem:[%s249 + $0x41] sm:$0xff]
      %v280 = vld [vmem:[%s249 + $0x51] sm:$0xff]
      %v281 = vld [vmem:[%s249 + $0x61] sm:$0xff]
      %v282 = vld [vmem:[%s249 + $0x71] sm:$0xff]
      %v283 = vperm.slane %v172, 1
      %v284 = vmul.f32 %v275, %v283
      %v285 = vmul.f32 %v276, %v283
      %v286 = vmul.f32 %v277, %v283
      %v287 = vmul.f32 %v278, %v283
      %v288 = vmul.f32 %v279, %v283
      %v289 = vmul.f32 %v280, %v283
      %v290 = vmul.f32 %v281, %v283
      %v291 = vmul.f32 %v282, %v283
      %v292 = vadd.f32 %v267, %v284
      %v293 = vadd.f32 %v268, %v285
      %v294 = vadd.f32 %v269, %v286
      %v295 = vadd.f32 %v270, %v287
      %v296 = vadd.f32 %v271, %v288
      %v297 = vadd.f32 %v272, %v289
      %v298 = vadd.f32 %v273, %v290
      %v299 = vadd.f32 %v274, %v291
      %v300 = vld [vmem:[%s249 + $0x2] sm:$0xff]
      %v301 = vld [vmem:[%s249 + $0x12] sm:$0xff]
      %v302 = vld [vmem:[%s249 + $0x22] sm:$0xff]
      %v303 = vld [vmem:[%s249 + $0x32] sm:$0xff]
      %v304 = vld [vmem:[%s249 + $0x42] sm:$0xff]
      %v305 = vld [vmem:[%s249 + $0x52] sm:$0xff]
      %v306 = vld [vmem:[%s249 + $0x62] sm:$0xff]
      %v307 = vld [vmem:[%s249 + $0x72] sm:$0xff]
      %v308 = vperm.slane %v172, 2
      %v309 = vmul.f32 %v300, %v308
      %v310 = vmul.f32 %v301, %v308
      %v311 = vmul.f32 %v302, %v308
      %v312 = vmul.f32 %v303, %v308
      %v313 = vmul.f32 %v304, %v308
      %v314 = vmul.f32 %v305, %v308
      %v315 = vmul.f32 %v306, %v308
      %v316 = vmul.f32 %v307, %v308
      %v317 = vadd.f32 %v292, %v309
      %v318 = vadd.f32 %v293, %v310
      %v319 = vadd.f32 %v294, %v311
      %v320 = vadd.f32 %v295, %v312
      %v321 = vadd.f32 %v296, %v313
      %v322 = vadd.f32 %v297, %v314
      %v323 = vadd.f32 %v298, %v315
      %v324 = vadd.f32 %v299, %v316
      %s325 = scalar_lea.vmem %s165, 32
      %v326 = vld [vmem:[%s325] sm:$0xff]
      %v327 = vld [vmem:[%s325 + $0x10] sm:$0xff]
      %v328 = vld [vmem:[%s325 + $0x20] sm:$0xff]
      %v329 = vld [vmem:[%s325 + $0x30] sm:$0xff]
      %v330 = vld [vmem:[%s325 + $0x40] sm:$0xff]
      %v331 = vld [vmem:[%s325 + $0x50] sm:$0xff]
      %v332 = vld [vmem:[%s325 + $0x60] sm:$0xff]
      %v333 = vld [vmem:[%s325 + $0x70] sm:$0xff]
      %v334 = vperm.slane %v173, 0
      %v335 = vmul.f32 %v326, %v334
      %v336 = vmul.f32 %v327, %v334
      %v337 = vmul.f32 %v328, %v334
      %v338 = vmul.f32 %v329, %v334
      %v339 = vmul.f32 %v330, %v334
      %v340 = vmul.f32 %v331, %v334
      %v341 = vmul.f32 %v332, %v334
      %v342 = vmul.f32 %v333, %v334
      %v343 = vadd.f32 %v317, %v335
      %v344 = vadd.f32 %v318, %v336
      %v345 = vadd.f32 %v319, %v337
      %v346 = vadd.f32 %v320, %v338
      %v347 = vadd.f32 %v321, %v339
      %v348 = vadd.f32 %v322, %v340
      %v349 = vadd.f32 %v323, %v341
      %v350 = vadd.f32 %v324, %v342
      %v351 = vld [vmem:[%s325 + $0x1] sm:$0xff]
      %v352 = vld [vmem:[%s325 + $0x11] sm:$0xff]
      %v353 = vld [vmem:[%s325 + $0x21] sm:$0xff]
      %v354 = vld [vmem:[%s325 + $0x31] sm:$0xff]
      %v355 = vld [vmem:[%s325 + $0x41] sm:$0xff]
      %v356 = vld [vmem:[%s325 + $0x51] sm:$0xff]
      %v357 = vld [vmem:[%s325 + $0x61] sm:$0xff]
      %v358 = vld [vmem:[%s325 + $0x71] sm:$0xff]
      %v359 = vperm.slane %v173, 1
      %v360 = vmul.f32 %v351, %v359
      %v361 = vmul.f32 %v352, %v359
      %v362 = vmul.f32 %v353, %v359
      %v363 = vmul.f32 %v354, %v359
      %v364 = vmul.f32 %v355, %v359
      %v365 = vmul.f32 %v356, %v359
      %v366 = vmul.f32 %v357, %v359
      %v367 = vmul.f32 %v358, %v359
      %v368 = vadd.f32 %v343, %v360
      %v369 = vadd.f32 %v344, %v361
      %v370 = vadd.f32 %v345, %v362
      %v371 = vadd.f32 %v346, %v363
      %v372 = vadd.f32 %v347, %v364
      %v373 = vadd.f32 %v348, %v365
      %v374 = vadd.f32 %v349, %v366
      %v375 = vadd.f32 %v350, %v367
      %v376 = vld [vmem:[%s325 + $0x2] sm:$0xff]
      %v377 = vld [vmem:[%s325 + $0x12] sm:$0xff]
      %v378 = vld [vmem:[%s325 + $0x22] sm:$0xff]
      %v379 = vld [vmem:[%s325 + $0x32] sm:$0xff]
      %v380 = vld [vmem:[%s325 + $0x42] sm:$0xff]
      %v381 = vld [vmem:[%s325 + $0x52] sm:$0xff]
      %v382 = vld [vmem:[%s325 + $0x62] sm:$0xff]
      %v383 = vld [vmem:[%s325 + $0x72] sm:$0xff]
      %v384 = vperm.slane %v173, 2
      %v385 = vmul.f32 %v376, %v384
      %v386 = vmul.f32 %v377, %v384
      %v387 = vmul.f32 %v378, %v384
      %v388 = vmul.f32 %v379, %v384
      %v389 = vmul.f32 %v380, %v384
      %v390 = vmul.f32 %v381, %v384
      %v391 = vmul.f32 %v382, %v384
      %v392 = vmul.f32 %v383, %v384
      %v393 = vadd.f32 %v368, %v385
      %v394 = vadd.f32 %v369, %v386
      %v395 = vadd.f32 %v370, %v387
      %v396 = vadd.f32 %v371, %v388
      %v397 = vadd.f32 %v372, %v389
      %v398 = vadd.f32 %v373, %v390
      %v399 = vadd.f32 %v374, %v391
      %v400 = vadd.f32 %v375, %v392
      %v401 = vld [vmem:[%s2] sm:$0x1]
      %v403 = vperm.slane %v401, 0
      %v405 = vadd.f32 %v393, %v403
      %v406 = vadd.f32 %v394, %v403
      %v407 = vadd.f32 %v395, %v403
      %v408 = vadd.f32 %v396, %v403
      %v409 = vadd.f32 %v397, %v403
      %v410 = vadd.f32 %v398, %v403
      %v411 = vadd.f32 %v399, %v403
      %v412 = vadd.f32 %v400, %v403
      %vm413 = vcmask 261120
      %414 = vst.msk [vmem:[%s170] sm:$0xff] %vm413, %v405
      %415 = vst.msk [vmem:[%s170 + $0x8] sm:$0xff] %vm413, %v406
      %416 = vst.msk [vmem:[%s170 + $0x10] sm:$0xff] %vm413, %v407
      %417 = vst.msk [vmem:[%s170 + $0x18] sm:$0xff] %vm413, %v408
      %418 = vst.msk [vmem:[%s170 + $0x20] sm:$0xff] %vm413, %v409
      %419 = vst.msk [vmem:[%s170 + $0x28] sm:$0xff] %vm413, %v410
      %420 = vst.msk [vmem:[%s170 + $0x30] sm:$0xff] %vm413, %v411
      %421 = vst.msk [vmem:[%s170 + $0x38] sm:$0xff] %vm413, %v412
      %p422 = scmp.lt.s32.totalorder %s14, 1
      %s423 = scalar_select %p422, %s14, 1
      %s424 = smul.addr %s423, 8
      %s425 = smul.addr %s424, 8
      %s426 = scalar_lea.vmem %s3, %s425
      // Predicated region
      $region33: #{ar_attention_pallas.8} parent=31 // pred_check
        %p427 = pneg %p100
      $region34: #{ar_attention_pallas.8} parent=31 // pred_check_branch
        %429 = sbr.rel (%p427) target = $region36
      $region35: #{ar_attention_pallas.8} parent=31 // pred_region
        _
      $region36: #{ar_attention_pallas.8} parent=31 // pred_fallthru
        _
    $region32: #{ar_attention_pallas.8} parent=5 // pred_fallthru
      _
    %p430 = scmp.le.s32.totalorder 2, %s9
    // Predicated region
    $region37: #{ar_attention_pallas.8} parent=5 // pred_check
      %p431 = pneg %p430
    $region38: #{ar_attention_pallas.8} parent=5 // pred_check_branch
      %433 = sbr.rel (%p431) target = $region40
    $region39: #{ar_attention_pallas.8} parent=5 // pred_region
      %s434 = ssub.s32 %s9, 2
      // Predicated region
      $region41: #{ar_attention_pallas.8} parent=39 // pred_check
        %p435 = pneg %p106
      $region42: #{ar_attention_pallas.8} parent=39 // pred_check_branch
        %437 = sbr.rel (%p435) target = $region44
      $region43: #{ar_attention_pallas.8} parent=39 // pred_region
        %p438 = scmp.lt.s32.totalorder %s15, 1
        %s439 = scalar_select %p438, %s15, 1
        %s440 = smul.addr %s439, 8
        %s441 = smul.addr %s440, 8
        %s442 = scalar_lea.vmem %s3, %s441
      $region44: #{ar_attention_pallas.8} parent=39 // pred_fallthru
        _
    $region40: #{ar_attention_pallas.8} parent=5 // pred_fallthru
      _
  $region6: #{ar_attention_pallas.8} parent=0 // loop_footer
    %s13 = sadd.s32 1, %s9
  $region7: #{ar_attention_pallas.8} parent=0 // loop_footer_branch
    %8 = sbr.rel target = $region3
  $region8: #{ar_attention_pallas.8} parent=0 // loop_exit
    _

</llo_original>
